<compile_context>
chip_gen: v5e
topology: v5e:2x2
jax: 0.10.0
libtpu: 0.0.40
codegen_flags: <defaults>
</compile_context>

<pallas_src>
import math
import functools

import numpy as np
import jax
import jax.numpy as jnp
from jax import lax
from jax.experimental import pallas as pl
from jax.experimental.pallas import tpu as pltpu

EPS = 1e-6          # matches TransformerEncoder(..., eps=1e-6)
NEG_INF = -1e30


# ----------------------------- in-kernel helpers -----------------------------
def _layernorm(y, gamma, beta, eps=EPS):
    mu = jnp.mean(y, axis=-1, keepdims=True)
    var = jnp.mean((y - mu) ** 2, axis=-1, keepdims=True)
    return (y - mu) * lax.rsqrt(var + eps) * gamma + beta


# --------------------------------- kernel ------------------------------------
def encoder_kernel(x_ref, pre_w_ref, pre_b_ref, pos_ref, mask_ref,
                   wqkv_ref, bqkv_ref, wo_ref, bo_ref, ag_ref, ab_ref,
                   w1_ref, b1_ref, w2_ref, b2_ref, fg_ref, fb_ref,
                   o_ref, *opt_out, num_heads):
    # x_ref:    (B, T, in_dim)     pre_w: (in_dim, D)     pos: (T, D)
    # wqkv_ref: (1, D, 3D) flat    wo_ref: (1, D, D) flat mask: (B, 1, T)
    # o_ref:    (B, T, D)  -- resident in VMEM across the layer grid axis
    attn_ref = opt_out[0] if opt_out else None      # optional (B, 1, T, T)
    B, T, D = o_ref.shape
    H = num_heads
    dh = D // H
    scale = 1.0 / math.sqrt(dh)

    # Layer 0 only: fused pre-projection + positional encoding (dropout == identity).
    @pl.when(pl.program_id(0) == 0)
    def _():
        xb = x_ref[...].reshape(B * T, x_ref.shape[-1])
        h0 = (jnp.dot(xb, pre_w_ref[...], preferred_element_type=jnp.float32)
              + pre_b_ref[...])
        o_ref[...] = h0.reshape(B, T, D) + pos_ref[...]

    h = o_ref[...]                        # (B, T, D), lives in VMEM between layers
    h2 = h.reshape(B * T, D)              # flat, lane-dense matmul operand
    mask = mask_ref[...]                  # (B, 1, T): 1.0 = valid key

    # ---------------- multi-head self-attention ----------------
    # ONE fused QKV projection: (B*T, 128) x (128, 384), lane-dense N = 3D.
    qkv = (jnp.dot(h2, wqkv_ref[0], preferred_element_type=jnp.float32)
           + bqkv_ref[0]).reshape(B, T, 3 * D)

    ctx_heads = []
    attn_sum = None
    for hd in range(H):                   # static unroll; scores/PV are per-head
        q_h = qkv[:, :, hd * dh:(hd + 1) * dh]              # (B, T, dh)
        k_h = qkv[:, :, D + hd * dh:D + (hd + 1) * dh]
        v_h = qkv[:, :, 2 * D + hd * dh:2 * D + (hd + 1) * dh]
        # einsum('bqd,bkd->bqk'): QK^T with batch dim B, no explicit transpose.
        s = lax.dot_general(q_h, k_h, (((2,), (2,)), ((0,), (0,))),
                            preferred_element_type=jnp.float32) * scale   # (B,T,T)
        s = jnp.where(mask > 0.0, s, NEG_INF)                             # key padding
        s = s - jnp.max(s, axis=-1, keepdims=True)
        e = jnp.exp(s)
        p = e * pl.reciprocal(jnp.sum(e, axis=-1, keepdims=True), approx=True)
        if attn_ref is not None:
            attn_sum = p if attn_sum is None else attn_sum + p
        # einsum('bqk,bkd->bqd'): attention-weighted values.
        ctx_heads.append(lax.dot_general(p, v_h, (((2,), (1,)), ((0,), (0,))),
                                         preferred_element_type=jnp.float32))
    if attn_ref is not None:
        attn_ref[...] = (attn_sum * (1.0 / H)).reshape(B, 1, T, T)        # head-avg

    # Lane-concat heads -> (B*T, D), then ONE (B*T,128)x(128,128) output projection.
    ctx = jnp.concatenate(ctx_heads, axis=-1).reshape(B * T, D)
    attn_out = jnp.dot(ctx, wo_ref[0], preferred_element_type=jnp.float32) + bo_ref[0]
    y = _layernorm(h2 + attn_out, ag_ref[0], ab_ref[0])                   # post-norm

    # -------------------- FFN: Linear -> ReLU -> Linear ------------------------
    ff = jnp.dot(y, w1_ref[0], preferred_element_type=jnp.float32) + b1_ref[0]
    ff = jnp.maximum(ff, 0.0)
    ff = jnp.dot(ff, w2_ref[0], preferred_element_type=jnp.float32) + b2_ref[0]
    o_ref[...] = _layernorm(y + ff, fg_ref[0], fb_ref[0]).reshape(B, T, D)


# --------------------------------- wrapper -----------------------------------
def _const_spec(shape):
    n = len(shape)
    return pl.BlockSpec(tuple(shape), lambda l, _n=n: (0,) * _n)


def _layer_spec(shape):
    n = len(shape)
    return pl.BlockSpec((1,) + tuple(shape[1:]),
                        lambda l, _n=n: (l,) + (0,) * (_n - 1))


def transformer_encoder_forward(x, x_len, params, num_heads, get_attention=False):
    B, T, in_dim = x.shape
    D = params["pre_w"].shape[1]
    L = len(params["layers"])

    pos = sinusoidal_pe(T, D)                                          # (T, D)
    mask = (jnp.arange(T)[None, :] < x_len[:, None]).astype(jnp.float32)
    mask = mask[:, None, :]                                            # (B, 1, T)

    # Per-layer stacked, FLAT weights (no head-major repacking needed).
    stack = lambda name: jnp.stack([lp[name] for lp in params["layers"]])
    wqkv = stack("wqkv")                  # (L, D, 3D)
    bqkv = stack("bqkv")                  # (L, 1, 3D)
    wo, bo = stack("wo"), stack("bo")     # (L, D, D), (L, 1, D)
    ag, ab = stack("ag"), stack("ab")
    w1, b1 = stack("w1"), stack("b1")     # (L, D, F), (L, 1, F)
    w2, b2 = stack("w2"), stack("b2")     # (L, F, D), (L, 1, D)
    fg, fb = stack("fg"), stack("fb")

    out_shape = [jax.ShapeDtypeStruct((B, T, D), jnp.float32)]
    out_specs = [pl.BlockSpec((B, T, D), lambda l: (0, 0, 0))]
    if get_attention:
        out_shape.append(jax.ShapeDtypeStruct((B, L, T, T), jnp.float32))
        out_specs.append(pl.BlockSpec((B, 1, T, T), lambda l: (0, l, 0, 0)))

    kernel = functools.partial(encoder_kernel, num_heads=num_heads)
    res = pl.pallas_call(
        kernel,
        out_shape=tuple(out_shape),
        grid=(L,),
        in_specs=[
            _const_spec(x.shape),
            _const_spec(params["pre_w"].shape),
            _const_spec(params["pre_b"].shape),
            _const_spec(pos.shape),
            _const_spec(mask.shape),
            _layer_spec(wqkv.shape), _layer_spec(bqkv.shape),
            _layer_spec(wo.shape), _layer_spec(bo.shape),
            _layer_spec(ag.shape), _layer_spec(ab.shape),
            _layer_spec(w1.shape), _layer_spec(b1.shape),
            _layer_spec(w2.shape), _layer_spec(b2.shape),
            _layer_spec(fg.shape), _layer_spec(fb.shape),
        ],
        out_specs=tuple(out_specs),
        compiler_params=pltpu.CompilerParams(
            dimension_semantics=("arbitrary",),         # layer axis carries state
            vmem_limit_bytes=48 * 1024 * 1024),
    )(x, params["pre_w"], params["pre_b"], pos, mask,
      wqkv, bqkv, wo, bo, ag, ab, w1, b1, w2, b2, fg, fb)

    other = {}
    if get_attention:
        h_out, attn_all = res
        other["attn"] = [attn_all[:, i] for i in range(L)]
    else:
        h_out = res[0] if isinstance(res, (tuple, list)) else res
    return h_out, other


# ----------------------------- model glue (JAX) -------------------------------
def sinusoidal_pe(T, D):
    pos = np.arange(T)[:, None].astype(np.float32)
    div = np.exp(np.arange(0, D, 2).astype(np.float32) * (-math.log(10000.0) / D))
    pe = np.zeros((T, D), dtype=np.float32)
    pe[:, 0::2] = np.sin(pos * div)
    pe[:, 1::2] = np.cos(pos * div)
    return jnp.asarray(pe)


def init_params(key, in_dim, d_model, num_layers, ffn_size):
    def dense(k, fan_in, fan_out):
        return jax.random.normal(k, (fan_in, fan_out), jnp.float32) * 0.02

    keys = jax.random.split(key, 1 + 4 * num_layers)
    params = {
        "pre_w": dense(keys[0], in_dim, d_model),
        "pre_b": jnp.zeros((1, d_model), jnp.float32),
        "layers": [],
    }
    for i in range(num_layers):
        k0, k1, k2, k3 = keys[1 + 4 * i:1 + 4 * (i + 1)]
        params["layers"].append({
            "wqkv": dense(k0, d_model, 3 * d_model),
            "bqkv": jnp.zeros((1, 3 * d_model), jnp.float32),
            "wo": dense(k1, d_model, d_model),
            "bo": jnp.zeros((1, d_model), jnp.float32),
            "ag": jnp.ones((1, d_model), jnp.float32),
            "ab": jnp.zeros((1, d_model), jnp.float32),
            "w1": dense(k2, d_model, ffn_size),
            "b1": jnp.zeros((1, ffn_size), jnp.float32),
            "w2": dense(k3, ffn_size, d_model),
            "b2": jnp.zeros((1, d_model), jnp.float32),
            "fg": jnp.ones((1, d_model), jnp.float32),
            "fb": jnp.zeros((1, d_model), jnp.float32),
        })
    return params


# ------------------------------ pure-JAX reference ----------------------------
def _ref_layernorm(y, g, b):
    mu = y.mean(-1, keepdims=True)
    var = ((y - mu) ** 2).mean(-1, keepdims=True)
    return (y - mu) / jnp.sqrt(var + EPS) * g + b


def ref_forward(x, x_len, params, num_heads):
    B, T, _ = x.shape
    D = params["pre_w"].shape[1]
    dh = D // num_heads
    pos = sinusoidal_pe(T, D)
    valid = jnp.arange(T)[None, :] < x_len[:, None]                   # (B, T)
    h = x @ params["pre_w"] + params["pre_b"][0] + pos[None]
    attns = []
    for lp in params["layers"]:
        qkv = h @ lp["wqkv"] + lp["bqkv"][0]
        q, k, v = jnp.split(qkv, 3, axis=-1)
        qh = q.reshape(B, T, num_heads, dh).transpose(0, 2, 1, 3)
        kh = k.reshape(B, T, num_heads, dh).transpose(0, 2, 1, 3)
        vh = v.reshape(B, T, num_heads, dh).transpose(0, 2, 1, 3)
        s = jnp.einsum("bhtd,bhsd->bhts", qh, kh) / math.sqrt(dh)
        s = jnp.where(valid[:, None, None, :], s, NEG_INF)
        p = jax.nn.softmax(s, axis=-1)
        attns.append(p.mean(axis=1))                                   # (B, T, T)
        ctx = jnp.einsum("bhts,bhsd->bhtd", p, vh).transpose(0, 2, 1, 3).reshape(B, T, D)
        h = _ref_layernorm(h + ctx @ lp["wo"] + lp["bo"][0], lp["ag"][0], lp["ab"][0])
        ff = jnp.maximum(h @ lp["w1"] + lp["b1"][0], 0.0) @ lp["w2"] + lp["b2"][0]
        h = _ref_layernorm(h + ff, lp["fg"][0], lp["fb"][0])
    return h, attns


# ----------------------------------- main -------------------------------------
if __name__ == "__main__":
    # Lane-dense test config: D=128 (lane dim), T=16 (multiple of 8), FFN=256.
    B, T, IN_DIM = 2, 16, 80
    D_MODEL, NUM_HEADS, FFN, LAYERS = 128, 4, 256, 2

    key = jax.random.PRNGKey(0)
    kx, kp = jax.random.split(key)
    x = jax.random.normal(kx, (B, T, IN_DIM), jnp.float32)
    x_len = jnp.array([T, 11], dtype=jnp.int32)

    params = init_params(kp, IN_DIM, D_MODEL, LAYERS, FFN)

    # Default inference path (no attention maps -> no narrow-lane writebacks).
    out_fast, _ = transformer_encoder_forward(x, x_len, params, NUM_HEADS)
    out_fast = jax.block_until_ready(out_fast)

    # Path with head-averaged attention maps, for correctness checks.
    out, other = transformer_encoder_forward(x, x_len, params, NUM_HEADS,
                                             get_attention=True)
    out = jax.block_until_ready(out)
    _ = jax.block_until_ready(other["attn"][-1])

    ref_out, ref_attn = ref_forward(x, x_len, params, NUM_HEADS)
    ref_out = jax.block_until_ready(ref_out)

    assert out.shape == (B, T, D_MODEL)
    assert other["attn"][0].shape == (B, T, T)
    np.testing.assert_allclose(np.asarray(out), np.asarray(ref_out),
                               atol=2e-3, rtol=2e-3)
    np.testing.assert_allclose(np.asarray(out_fast), np.asarray(ref_out),
                               atol=2e-3, rtol=2e-3)
    for a_k, a_r in zip(other["attn"], ref_attn):
        np.testing.assert_allclose(np.asarray(a_k), np.asarray(a_r),
                                   atol=2e-3, rtol=2e-3)

    print("KERNEL_OK")
</pallas_src>

<mosaic_0001>
module attributes {stable_mosaic.version = 11 : i64} {
  func.func @encoder_kernel(%arg0: i32, %arg1: memref<2x16x80xf32, #tpu.memory_space<vmem>>, %arg2: memref<80x128xf32, #tpu.memory_space<vmem>>, %arg3: memref<1x128xf32, #tpu.memory_space<vmem>>, %arg4: memref<16x128xf32, #tpu.memory_space<vmem>>, %arg5: memref<2x1x16xf32, #tpu.memory_space<vmem>>, %arg6: memref<1x128x384xf32, #tpu.memory_space<vmem>>, %arg7: memref<1x1x384xf32, #tpu.memory_space<vmem>>, %arg8: memref<1x128x128xf32, #tpu.memory_space<vmem>>, %arg9: memref<1x1x128xf32, #tpu.memory_space<vmem>>, %arg10: memref<1x1x128xf32, #tpu.memory_space<vmem>>, %arg11: memref<1x1x128xf32, #tpu.memory_space<vmem>>, %arg12: memref<1x128x256xf32, #tpu.memory_space<vmem>>, %arg13: memref<1x1x256xf32, #tpu.memory_space<vmem>>, %arg14: memref<1x256x128xf32, #tpu.memory_space<vmem>>, %arg15: memref<1x1x128xf32, #tpu.memory_space<vmem>>, %arg16: memref<1x1x128xf32, #tpu.memory_space<vmem>>, %arg17: memref<1x1x128xf32, #tpu.memory_space<vmem>>, %arg18: memref<2x16x128xf32, #tpu.memory_space<vmem>>) attributes {dimension_semantics = [#tpu.dimension_semantics<arbitrary>], iteration_bounds = array<i64: 2>, scalar_prefetch = 0 : i64, scratch_operands = 0 : i64, tpu.core_type = #tpu.core_type<tc>, window_params = [{pipeline_mode = #tpu.pipeline_mode<synchronous>, transform_indices = @transform_0, window_bounds = array<i64: 2, 16, 80>}, {pipeline_mode = #tpu.pipeline_mode<synchronous>, transform_indices = @transform_1, window_bounds = array<i64: 80, 128>}, {pipeline_mode = #tpu.pipeline_mode<synchronous>, transform_indices = @transform_2, window_bounds = array<i64: 1, 128>}, {pipeline_mode = #tpu.pipeline_mode<synchronous>, transform_indices = @transform_3, window_bounds = array<i64: 16, 128>}, {pipeline_mode = #tpu.pipeline_mode<synchronous>, transform_indices = @transform_4, window_bounds = array<i64: 2, 1, 16>}, {transform_indices = @transform_5, window_bounds = array<i64: 1, 128, 384>}, {transform_indices = @transform_6, window_bounds = array<i64: 1, 1, 384>}, {transform_indices = @transform_7, window_bounds = array<i64: 1, 128, 128>}, {transform_indices = @transform_8, window_bounds = array<i64: 1, 1, 128>}, {transform_indices = @transform_9, window_bounds = array<i64: 1, 1, 128>}, {transform_indices = @transform_10, window_bounds = array<i64: 1, 1, 128>}, {transform_indices = @transform_11, window_bounds = array<i64: 1, 128, 256>}, {transform_indices = @transform_12, window_bounds = array<i64: 1, 1, 256>}, {transform_indices = @transform_13, window_bounds = array<i64: 1, 256, 128>}, {transform_indices = @transform_14, window_bounds = array<i64: 1, 1, 128>}, {transform_indices = @transform_15, window_bounds = array<i64: 1, 1, 128>}, {transform_indices = @transform_16, window_bounds = array<i64: 1, 1, 128>}, {pipeline_mode = #tpu.pipeline_mode<synchronous>, transform_indices = @transform_17, window_bounds = array<i64: 2, 16, 128>}]} {
    %c0_i32 = arith.constant 0 : i32
    %0 = arith.cmpi eq, %arg0, %c0_i32 : i32
    %1 = arith.extui %0 : i1 to i32
    %c0_i32_0 = arith.constant 0 : i32
    %2 = arith.cmpi ne, %1, %c0_i32_0 : i32
    scf.if %2 {
      %c0_87 = arith.constant 0 : index
      %c0_88 = arith.constant 0 : index
      %c0_89 = arith.constant 0 : index
      %187 = vector.load %arg1[%c0_87, %c0_88, %c0_89] : memref<2x16x80xf32, #tpu.memory_space<vmem>>, vector<2x16x80xf32>
      %188 = vector.shape_cast %187 : vector<2x16x80xf32> to vector<32x80xf32>
      %c0_90 = arith.constant 0 : index
      %c0_91 = arith.constant 0 : index
      %189 = vector.load %arg2[%c0_90, %c0_91] : memref<80x128xf32, #tpu.memory_space<vmem>>, vector<80x128xf32>
      %cst_92 = arith.constant dense<0.000000e+00> : vector<32x128xf32>
      %190 = tpu.matmul %188, %189, %cst_92 {dimension_numbers = #tpu.dot_dimension_numbers<[1], [0], [0], [1], [0, 0, 1, 1], [], []>} : vector<32x80xf32>, vector<80x128xf32>, vector<32x128xf32> -> vector<32x128xf32>
      %c0_93 = arith.constant 0 : index
      %c0_94 = arith.constant 0 : index
      %191 = vector.load %arg3[%c0_93, %c0_94] : memref<1x128xf32, #tpu.memory_space<vmem>>, vector<1x128xf32>
      %192 = vector.broadcast %191 : vector<1x128xf32> to vector<32x128xf32>
      %193 = arith.addf %190, %192 : vector<32x128xf32>
      %194 = vector.shape_cast %193 : vector<32x128xf32> to vector<2x16x128xf32>
      %c0_95 = arith.constant 0 : index
      %c0_96 = arith.constant 0 : index
      %195 = vector.load %arg4[%c0_95, %c0_96] : memref<16x128xf32, #tpu.memory_space<vmem>>, vector<16x128xf32>
      %196 = vector.shape_cast %195 : vector<16x128xf32> to vector<1x16x128xf32>
      %197 = vector.broadcast %196 : vector<1x16x128xf32> to vector<2x16x128xf32>
      %198 = arith.addf %194, %197 : vector<2x16x128xf32>
      %c0_97 = arith.constant 0 : index
      %c0_98 = arith.constant 0 : index
      %c0_99 = arith.constant 0 : index
      %199 = vector.load %arg18[%c0_97, %c0_98, %c0_99] : memref<2x16x128xf32, #tpu.memory_space<vmem>>, vector<2x16x128xf32>
      tpu.vector_store %arg18[%c0_97, %c0_98, %c0_99], %198 {strides = array<i32>} : memref<2x16x128xf32, #tpu.memory_space<vmem>>, vector<2x16x128xf32>,
    } else {
    }
    %c0 = arith.constant 0 : index
    %c0_1 = arith.constant 0 : index
    %c0_2 = arith.constant 0 : index
    %3 = vector.load %arg18[%c0, %c0_1, %c0_2] : memref<2x16x128xf32, #tpu.memory_space<vmem>>, vector<2x16x128xf32>
    %4 = vector.shape_cast %3 : vector<2x16x128xf32> to vector<32x128xf32>
    %c0_3 = arith.constant 0 : index
    %c0_4 = arith.constant 0 : index
    %c0_5 = arith.constant 0 : index
    %5 = vector.load %arg5[%c0_3, %c0_4, %c0_5] : memref<2x1x16xf32, #tpu.memory_space<vmem>>, vector<2x1x16xf32>
    %c0_6 = arith.constant 0 : index
    %c0_7 = arith.constant 0 : index
    %c0_8 = arith.constant 0 : index
    %6 = vector.load %arg6[%c0_6, %c0_7, %c0_8] : memref<1x128x384xf32, #tpu.memory_space<vmem>>, vector<1x128x384xf32>
    %7 = vector.shape_cast %6 : vector<1x128x384xf32> to vector<128x384xf32>
    %cst = arith.constant dense<0.000000e+00> : vector<32x384xf32>
    %8 = tpu.matmul %4, %7, %cst {dimension_numbers = #tpu.dot_dimension_numbers<[1], [0], [0], [1], [0, 0, 1, 1], [], []>} : vector<32x128xf32>, vector<128x384xf32>, vector<32x384xf32> -> vector<32x384xf32>
    %c0_9 = arith.constant 0 : index
    %c0_10 = arith.constant 0 : index
    %c0_11 = arith.constant 0 : index
    %9 = vector.load %arg7[%c0_9, %c0_10, %c0_11] : memref<1x1x384xf32, #tpu.memory_space<vmem>>, vector<1x1x384xf32>
    %10 = vector.shape_cast %9 : vector<1x1x384xf32> to vector<1x384xf32>
    %11 = vector.broadcast %10 : vector<1x384xf32> to vector<32x384xf32>
    %12 = arith.addf %8, %11 : vector<32x384xf32>
    %13 = vector.shape_cast %12 : vector<32x384xf32> to vector<2x16x384xf32>
    %14 = vector.extract_strided_slice %13 {offsets = [0, 0, 0], sizes = [2, 16, 32], strides = [1, 1, 1]} : vector<2x16x384xf32> to vector<2x16x32xf32>
    %15 = vector.extract_strided_slice %13 {offsets = [0, 0, 128], sizes = [2, 16, 32], strides = [1, 1, 1]} : vector<2x16x384xf32> to vector<2x16x32xf32>
    %16 = vector.extract_strided_slice %13 {offsets = [0, 0, 256], sizes = [2, 16, 32], strides = [1, 1, 1]} : vector<2x16x384xf32> to vector<2x16x32xf32>
    %cst_12 = arith.constant dense<0.000000e+00> : vector<2x16x16xf32>
    %17 = tpu.matmul %14, %15, %cst_12 {dimension_numbers = #tpu.dot_dimension_numbers<[2], [2], [1], [1], [0, 0, 0, 1, 1, 1], [0], [0]>} : vector<2x16x32xf32>, vector<2x16x32xf32>, vector<2x16x16xf32> -> vector<2x16x16xf32>
    %cst_13 = arith.constant 0.176776692 : f32
    %18 = vector.broadcast %cst_13 : f32 to vector<2x16x16xf32>
    %19 = arith.mulf %17, %18 : vector<2x16x16xf32>
    %cst_14 = arith.constant 0.000000e+00 : f32
    %20 = vector.broadcast %cst_14 : f32 to vector<2x1x16xf32>
    %21 = arith.cmpf ogt, %5, %20 : vector<2x1x16xf32>
    %cst_15 = arith.constant -1.000000e+30 : f32
    %22 = vector.shape_cast %21 : vector<2x1x16xi1> to vector<2x1x16xi1>
    %23 = vector.broadcast %22 : vector<2x1x16xi1> to vector<2x16x16xi1>
    %24 = vector.broadcast %cst_15 : f32 to vector<2x16x16xf32>
    %25 = arith.select %23, %19, %24 : vector<2x16x16xi1>, vector<2x16x16xf32>
    %cst_16 = arith.constant dense<0xFF800000> : vector<2x16xf32>
    %26 = vector.multi_reduction <maximumf>, %25, %cst_16 [2] : vector<2x16x16xf32> to vector<2x16xf32>
    %27 = vector.shape_cast %26 : vector<2x16xf32> to vector<2x16x1xf32>
    %28 = vector.broadcast %27 : vector<2x16x1xf32> to vector<2x16x16xf32>
    %29 = arith.subf %25, %28 : vector<2x16x16xf32>
    %30 = math.exp %29 : vector<2x16x16xf32>
    %cst_17 = arith.constant dense<0.000000e+00> : vector<2x16xf32>
    %31 = vector.multi_reduction <add>, %30, %cst_17 [2] : vector<2x16x16xf32> to vector<2x16xf32>
    %32 = vector.shape_cast %31 : vector<2x16xf32> to vector<2x16x1xf32>
    %33 = tpu.reciprocal %32 {approx = true} : vector<2x16x1xf32> -> vector<2x16x1xf32>
    %34 = vector.broadcast %33 : vector<2x16x1xf32> to vector<2x16x16xf32>
    %35 = arith.mulf %30, %34 : vector<2x16x16xf32>
    %cst_18 = arith.constant dense<0.000000e+00> : vector<2x16x32xf32>
    %36 = tpu.matmul %35, %16, %cst_18 {dimension_numbers = #tpu.dot_dimension_numbers<[2], [1], [1], [2], [0, 0, 0, 1, 1, 2], [0], [0]>} : vector<2x16x16xf32>, vector<2x16x32xf32>, vector<2x16x32xf32> -> vector<2x16x32xf32>
    %37 = vector.extract_strided_slice %13 {offsets = [0, 0, 32], sizes = [2, 16, 32], strides = [1, 1, 1]} : vector<2x16x384xf32> to vector<2x16x32xf32>
    %38 = vector.extract_strided_slice %13 {offsets = [0, 0, 160], sizes = [2, 16, 32], strides = [1, 1, 1]} : vector<2x16x384xf32> to vector<2x16x32xf32>
    %39 = vector.extract_strided_slice %13 {offsets = [0, 0, 288], sizes = [2, 16, 32], strides = [1, 1, 1]} : vector<2x16x384xf32> to vector<2x16x32xf32>
    %cst_19 = arith.constant dense<0.000000e+00> : vector<2x16x16xf32>
    %40 = tpu.matmul %37, %38, %cst_19 {dimension_numbers = #tpu.dot_dimension_numbers<[2], [2], [1], [1], [0, 0, 0, 1, 1, 1], [0], [0]>} : vector<2x16x32xf32>, vector<2x16x32xf32>, vector<2x16x16xf32> -> vector<2x16x16xf32>
    %cst_20 = arith.constant 0.176776692 : f32
    %41 = vector.broadcast %cst_20 : f32 to vector<2x16x16xf32>
    %42 = arith.mulf %40, %41 : vector<2x16x16xf32>
    %cst_21 = arith.constant 0.000000e+00 : f32
    %43 = vector.broadcast %cst_21 : f32 to vector<2x1x16xf32>
    %44 = arith.cmpf ogt, %5, %43 : vector<2x1x16xf32>
    %cst_22 = arith.constant -1.000000e+30 : f32
    %45 = vector.shape_cast %44 : vector<2x1x16xi1> to vector<2x1x16xi1>
    %46 = vector.broadcast %45 : vector<2x1x16xi1> to vector<2x16x16xi1>
    %47 = vector.broadcast %cst_22 : f32 to vector<2x16x16xf32>
    %48 = arith.select %46, %42, %47 : vector<2x16x16xi1>, vector<2x16x16xf32>
    %cst_23 = arith.constant dense<0xFF800000> : vector<2x16xf32>
    %49 = vector.multi_reduction <maximumf>, %48, %cst_23 [2] : vector<2x16x16xf32> to vector<2x16xf32>
    %50 = vector.shape_cast %49 : vector<2x16xf32> to vector<2x16x1xf32>
    %51 = vector.broadcast %50 : vector<2x16x1xf32> to vector<2x16x16xf32>
    %52 = arith.subf %48, %51 : vector<2x16x16xf32>
    %53 = math.exp %52 : vector<2x16x16xf32>
    %cst_24 = arith.constant dense<0.000000e+00> : vector<2x16xf32>
    %54 = vector.multi_reduction <add>, %53, %cst_24 [2] : vector<2x16x16xf32> to vector<2x16xf32>
    %55 = vector.shape_cast %54 : vector<2x16xf32> to vector<2x16x1xf32>
    %56 = tpu.reciprocal %55 {approx = true} : vector<2x16x1xf32> -> vector<2x16x1xf32>
    %57 = vector.broadcast %56 : vector<2x16x1xf32> to vector<2x16x16xf32>
    %58 = arith.mulf %53, %57 : vector<2x16x16xf32>
    %cst_25 = arith.constant dense<0.000000e+00> : vector<2x16x32xf32>
    %59 = tpu.matmul %58, %39, %cst_25 {dimension_numbers = #tpu.dot_dimension_numbers<[2], [1], [1], [2], [0, 0, 0, 1, 1, 2], [0], [0]>} : vector<2x16x16xf32>, vector<2x16x32xf32>, vector<2x16x32xf32> -> vector<2x16x32xf32>
    %60 = vector.extract_strided_slice %13 {offsets = [0, 0, 64], sizes = [2, 16, 32], strides = [1, 1, 1]} : vector<2x16x384xf32> to vector<2x16x32xf32>
    %61 = vector.extract_strided_slice %13 {offsets = [0, 0, 192], sizes = [2, 16, 32], strides = [1, 1, 1]} : vector<2x16x384xf32> to vector<2x16x32xf32>
    %62 = vector.extract_strided_slice %13 {offsets = [0, 0, 320], sizes = [2, 16, 32], strides = [1, 1, 1]} : vector<2x16x384xf32> to vector<2x16x32xf32>
    %cst_26 = arith.constant dense<0.000000e+00> : vector<2x16x16xf32>
    %63 = tpu.matmul %60, %61, %cst_26 {dimension_numbers = #tpu.dot_dimension_numbers<[2], [2], [1], [1], [0, 0, 0, 1, 1, 1], [0], [0]>} : vector<2x16x32xf32>, vector<2x16x32xf32>, vector<2x16x16xf32> -> vector<2x16x16xf32>
    %cst_27 = arith.constant 0.176776692 : f32
    %64 = vector.broadcast %cst_27 : f32 to vector<2x16x16xf32>
    %65 = arith.mulf %63, %64 : vector<2x16x16xf32>
    %cst_28 = arith.constant 0.000000e+00 : f32
    %66 = vector.broadcast %cst_28 : f32 to vector<2x1x16xf32>
    %67 = arith.cmpf ogt, %5, %66 : vector<2x1x16xf32>
    %cst_29 = arith.constant -1.000000e+30 : f32
    %68 = vector.shape_cast %67 : vector<2x1x16xi1> to vector<2x1x16xi1>
    %69 = vector.broadcast %68 : vector<2x1x16xi1> to vector<2x16x16xi1>
    %70 = vector.broadcast %cst_29 : f32 to vector<2x16x16xf32>
    %71 = arith.select %69, %65, %70 : vector<2x16x16xi1>, vector<2x16x16xf32>
    %cst_30 = arith.constant dense<0xFF800000> : vector<2x16xf32>
    %72 = vector.multi_reduction <maximumf>, %71, %cst_30 [2] : vector<2x16x16xf32> to vector<2x16xf32>
    %73 = vector.shape_cast %72 : vector<2x16xf32> to vector<2x16x1xf32>
    %74 = vector.broadcast %73 : vector<2x16x1xf32> to vector<2x16x16xf32>
    %75 = arith.subf %71, %74 : vector<2x16x16xf32>
    %76 = math.exp %75 : vector<2x16x16xf32>
    %cst_31 = arith.constant dense<0.000000e+00> : vector<2x16xf32>
    %77 = vector.multi_reduction <add>, %76, %cst_31 [2] : vector<2x16x16xf32> to vector<2x16xf32>
    %78 = vector.shape_cast %77 : vector<2x16xf32> to vector<2x16x1xf32>
    %79 = tpu.reciprocal %78 {approx = true} : vector<2x16x1xf32> -> vector<2x16x1xf32>
    %80 = vector.broadcast %79 : vector<2x16x1xf32> to vector<2x16x16xf32>
    %81 = arith.mulf %76, %80 : vector<2x16x16xf32>
    %cst_32 = arith.constant dense<0.000000e+00> : vector<2x16x32xf32>
    %82 = tpu.matmul %81, %62, %cst_32 {dimension_numbers = #tpu.dot_dimension_numbers<[2], [1], [1], [2], [0, 0, 0, 1, 1, 2], [0], [0]>} : vector<2x16x16xf32>, vector<2x16x32xf32>, vector<2x16x32xf32> -> vector<2x16x32xf32>
    %83 = vector.extract_strided_slice %13 {offsets = [0, 0, 96], sizes = [2, 16, 32], strides = [1, 1, 1]} : vector<2x16x384xf32> to vector<2x16x32xf32>
    %84 = vector.extract_strided_slice %13 {offsets = [0, 0, 224], sizes = [2, 16, 32], strides = [1, 1, 1]} : vector<2x16x384xf32> to vector<2x16x32xf32>
    %85 = vector.extract_strided_slice %13 {offsets = [0, 0, 352], sizes = [2, 16, 32], strides = [1, 1, 1]} : vector<2x16x384xf32> to vector<2x16x32xf32>
    %cst_33 = arith.constant dense<0.000000e+00> : vector<2x16x16xf32>
    %86 = tpu.matmul %83, %84, %cst_33 {dimension_numbers = #tpu.dot_dimension_numbers<[2], [2], [1], [1], [0, 0, 0, 1, 1, 1], [0], [0]>} : vector<2x16x32xf32>, vector<2x16x32xf32>, vector<2x16x16xf32> -> vector<2x16x16xf32>
    %cst_34 = arith.constant 0.176776692 : f32
    %87 = vector.broadcast %cst_34 : f32 to vector<2x16x16xf32>
    %88 = arith.mulf %86, %87 : vector<2x16x16xf32>
    %cst_35 = arith.constant 0.000000e+00 : f32
    %89 = vector.broadcast %cst_35 : f32 to vector<2x1x16xf32>
    %90 = arith.cmpf ogt, %5, %89 : vector<2x1x16xf32>
    %cst_36 = arith.constant -1.000000e+30 : f32
    %91 = vector.shape_cast %90 : vector<2x1x16xi1> to vector<2x1x16xi1>
    %92 = vector.broadcast %91 : vector<2x1x16xi1> to vector<2x16x16xi1>
    %93 = vector.broadcast %cst_36 : f32 to vector<2x16x16xf32>
    %94 = arith.select %92, %88, %93 : vector<2x16x16xi1>, vector<2x16x16xf32>
    %cst_37 = arith.constant dense<0xFF800000> : vector<2x16xf32>
    %95 = vector.multi_reduction <maximumf>, %94, %cst_37 [2] : vector<2x16x16xf32> to vector<2x16xf32>
    %96 = vector.shape_cast %95 : vector<2x16xf32> to vector<2x16x1xf32>
    %97 = vector.broadcast %96 : vector<2x16x1xf32> to vector<2x16x16xf32>
    %98 = arith.subf %94, %97 : vector<2x16x16xf32>
    %99 = math.exp %98 : vector<2x16x16xf32>
    %cst_38 = arith.constant dense<0.000000e+00> : vector<2x16xf32>
    %100 = vector.multi_reduction <add>, %99, %cst_38 [2] : vector<2x16x16xf32> to vector<2x16xf32>
    %101 = vector.shape_cast %100 : vector<2x16xf32> to vector<2x16x1xf32>
    %102 = tpu.reciprocal %101 {approx = true} : vector<2x16x1xf32> -> vector<2x16x1xf32>
    %103 = vector.broadcast %102 : vector<2x16x1xf32> to vector<2x16x16xf32>
    %104 = arith.mulf %99, %103 : vector<2x16x16xf32>
    %cst_39 = arith.constant dense<0.000000e+00> : vector<2x16x32xf32>
    %105 = tpu.matmul %104, %85, %cst_39 {dimension_numbers = #tpu.dot_dimension_numbers<[2], [1], [1], [2], [0, 0, 0, 1, 1, 2], [0], [0]>} : vector<2x16x16xf32>, vector<2x16x32xf32>, vector<2x16x32xf32> -> vector<2x16x32xf32>
    %106 = tpu.concatenate %36, %59, %82, %105 in 2 : vector<2x16x32xf32>, vector<2x16x32xf32>, vector<2x16x32xf32>, vector<2x16x32xf32> -> vector<2x16x128xf32>
    %107 = vector.shape_cast %106 : vector<2x16x128xf32> to vector<32x128xf32>
    %c0_40 = arith.constant 0 : index
    %c0_41 = arith.constant 0 : index
    %c0_42 = arith.constant 0 : index
    %108 = vector.load %arg8[%c0_40, %c0_41, %c0_42] : memref<1x128x128xf32, #tpu.memory_space<vmem>>, vector<1x128x128xf32>
    %109 = vector.shape_cast %108 : vector<1x128x128xf32> to vector<128x128xf32>
    %cst_43 = arith.constant dense<0.000000e+00> : vector<32x128xf32>
    %110 = tpu.matmul %107, %109, %cst_43 {dimension_numbers = #tpu.dot_dimension_numbers<[1], [0], [0], [1], [0, 0, 1, 1], [], []>} : vector<32x128xf32>, vector<128x128xf32>, vector<32x128xf32> -> vector<32x128xf32>
    %c0_44 = arith.constant 0 : index
    %c0_45 = arith.constant 0 : index
    %c0_46 = arith.constant 0 : index
    %111 = vector.load %arg9[%c0_44, %c0_45, %c0_46] : memref<1x1x128xf32, #tpu.memory_space<vmem>>, vector<1x1x128xf32>
    %112 = vector.shape_cast %111 : vector<1x1x128xf32> to vector<1x128xf32>
    %113 = vector.broadcast %112 : vector<1x128xf32> to vector<32x128xf32>
    %114 = arith.addf %110, %113 : vector<32x128xf32>
    %115 = arith.addf %4, %114 : vector<32x128xf32>
    %c0_47 = arith.constant 0 : index
    %c0_48 = arith.constant 0 : index
    %c0_49 = arith.constant 0 : index
    %116 = vector.load %arg10[%c0_47, %c0_48, %c0_49] : memref<1x1x128xf32, #tpu.memory_space<vmem>>, vector<1x1x128xf32>
    %117 = vector.shape_cast %116 : vector<1x1x128xf32> to vector<1x128xf32>
    %c0_50 = arith.constant 0 : index
    %c0_51 = arith.constant 0 : index
    %c0_52 = arith.constant 0 : index
    %118 = vector.load %arg11[%c0_50, %c0_51, %c0_52] : memref<1x1x128xf32, #tpu.memory_space<vmem>>, vector<1x1x128xf32>
    %119 = vector.shape_cast %118 : vector<1x1x128xf32> to vector<1x128xf32>
    %cst_53 = arith.constant dense<0.000000e+00> : vector<32xf32>
    %120 = vector.multi_reduction <add>, %115, %cst_53 [1] : vector<32x128xf32> to vector<32xf32>
    %121 = vector.shape_cast %120 : vector<32xf32> to vector<32x1xf32>
    %cst_54 = arith.constant 1.280000e+02 : f32
    %122 = vector.broadcast %cst_54 : f32 to vector<32x1xf32>
    %123 = arith.divf %121, %122 : vector<32x1xf32>
    %124 = vector.broadcast %123 : vector<32x1xf32> to vector<32x128xf32>
    %125 = arith.subf %115, %124 : vector<32x128xf32>
    %126 = arith.mulf %125, %125 : vector<32x128xf32>
    %cst_55 = arith.constant dense<0.000000e+00> : vector<32xf32>
    %127 = vector.multi_reduction <add>, %126, %cst_55 [1] : vector<32x128xf32> to vector<32xf32>
    %128 = vector.shape_cast %127 : vector<32xf32> to vector<32x1xf32>
    %cst_56 = arith.constant 1.280000e+02 : f32
    %129 = vector.broadcast %cst_56 : f32 to vector<32x1xf32>
    %130 = arith.divf %128, %129 : vector<32x1xf32>
    %131 = vector.broadcast %123 : vector<32x1xf32> to vector<32x128xf32>
    %132 = arith.subf %115, %131 : vector<32x128xf32>
    %cst_57 = arith.constant 9.99999997E-7 : f32
    %133 = vector.broadcast %cst_57 : f32 to vector<32x1xf32>
    %134 = arith.addf %130, %133 : vector<32x1xf32>
    %135 = math.rsqrt %134 : vector<32x1xf32>
    %136 = vector.broadcast %135 : vector<32x1xf32> to vector<32x128xf32>
    %137 = arith.mulf %132, %136 : vector<32x128xf32>
    %138 = vector.broadcast %117 : vector<1x128xf32> to vector<32x128xf32>
    %139 = arith.mulf %137, %138 : vector<32x128xf32>
    %140 = vector.broadcast %119 : vector<1x128xf32> to vector<32x128xf32>
    %141 = arith.addf %139, %140 : vector<32x128xf32>
    %c0_58 = arith.constant 0 : index
    %c0_59 = arith.constant 0 : index
    %c0_60 = arith.constant 0 : index
    %142 = vector.load %arg12[%c0_58, %c0_59, %c0_60] : memref<1x128x256xf32, #tpu.memory_space<vmem>>, vector<1x128x256xf32>
    %143 = vector.shape_cast %142 : vector<1x128x256xf32> to vector<128x256xf32>
    %cst_61 = arith.constant dense<0.000000e+00> : vector<32x256xf32>
    %144 = tpu.matmul %141, %143, %cst_61 {dimension_numbers = #tpu.dot_dimension_numbers<[1], [0], [0], [1], [0, 0, 1, 1], [], []>} : vector<32x128xf32>, vector<128x256xf32>, vector<32x256xf32> -> vector<32x256xf32>
    %c0_62 = arith.constant 0 : index
    %c0_63 = arith.constant 0 : index
    %c0_64 = arith.constant 0 : index
    %145 = vector.load %arg13[%c0_62, %c0_63, %c0_64] : memref<1x1x256xf32, #tpu.memory_space<vmem>>, vector<1x1x256xf32>
    %146 = vector.shape_cast %145 : vector<1x1x256xf32> to vector<1x256xf32>
    %147 = vector.broadcast %146 : vector<1x256xf32> to vector<32x256xf32>
    %148 = arith.addf %144, %147 : vector<32x256xf32>
    %cst_65 = arith.constant 0.000000e+00 : f32
    %149 = vector.broadcast %cst_65 : f32 to vector<32x256xf32>
    %150 = arith.maximumf %148, %149 : vector<32x256xf32>
    %c0_66 = arith.constant 0 : index
    %c0_67 = arith.constant 0 : index
    %c0_68 = arith.constant 0 : index
    %151 = vector.load %arg14[%c0_66, %c0_67, %c0_68] : memref<1x256x128xf32, #tpu.memory_space<vmem>>, vector<1x256x128xf32>
    %152 = vector.shape_cast %151 : vector<1x256x128xf32> to vector<256x128xf32>
    %cst_69 = arith.constant dense<0.000000e+00> : vector<32x128xf32>
    %153 = tpu.matmul %150, %152, %cst_69 {dimension_numbers = #tpu.dot_dimension_numbers<[1], [0], [0], [1], [0, 0, 1, 1], [], []>} : vector<32x256xf32>, vector<256x128xf32>, vector<32x128xf32> -> vector<32x128xf32>
    %c0_70 = arith.constant 0 : index
    %c0_71 = arith.constant 0 : index
    %c0_72 = arith.constant 0 : index
    %154 = vector.load %arg15[%c0_70, %c0_71, %c0_72] : memref<1x1x128xf32, #tpu.memory_space<vmem>>, vector<1x1x128xf32>
    %155 = vector.shape_cast %154 : vector<1x1x128xf32> to vector<1x128xf32>
    %156 = vector.broadcast %155 : vector<1x128xf32> to vector<32x128xf32>
    %157 = arith.addf %153, %156 : vector<32x128xf32>
    %158 = arith.addf %141, %157 : vector<32x128xf32>
    %c0_73 = arith.constant 0 : index
    %c0_74 = arith.constant 0 : index
    %c0_75 = arith.constant 0 : index
    %159 = vector.load %arg16[%c0_73, %c0_74, %c0_75] : memref<1x1x128xf32, #tpu.memory_space<vmem>>, vector<1x1x128xf32>
    %160 = vector.shape_cast %159 : vector<1x1x128xf32> to vector<1x128xf32>
    %c0_76 = arith.constant 0 : index
    %c0_77 = arith.constant 0 : index
    %c0_78 = arith.constant 0 : index
    %161 = vector.load %arg17[%c0_76, %c0_77, %c0_78] : memref<1x1x128xf32, #tpu.memory_space<vmem>>, vector<1x1x128xf32>
    %162 = vector.shape_cast %161 : vector<1x1x128xf32> to vector<1x128xf32>
    %cst_79 = arith.constant dense<0.000000e+00> : vector<32xf32>
    %163 = vector.multi_reduction <add>, %158, %cst_79 [1] : vector<32x128xf32> to vector<32xf32>
    %164 = vector.shape_cast %163 : vector<32xf32> to vector<32x1xf32>
    %cst_80 = arith.constant 1.280000e+02 : f32
    %165 = vector.broadcast %cst_80 : f32 to vector<32x1xf32>
    %166 = arith.divf %164, %165 : vector<32x1xf32>
    %167 = vector.broadcast %166 : vector<32x1xf32> to vector<32x128xf32>
    %168 = arith.subf %158, %167 : vector<32x128xf32>
    %169 = arith.mulf %168, %168 : vector<32x128xf32>
    %cst_81 = arith.constant dense<0.000000e+00> : vector<32xf32>
    %170 = vector.multi_reduction <add>, %169, %cst_81 [1] : vector<32x128xf32> to vector<32xf32>
    %171 = vector.shape_cast %170 : vector<32xf32> to vector<32x1xf32>
    %cst_82 = arith.constant 1.280000e+02 : f32
    %172 = vector.broadcast %cst_82 : f32 to vector<32x1xf32>
    %173 = arith.divf %171, %172 : vector<32x1xf32>
    %174 = vector.broadcast %166 : vector<32x1xf32> to vector<32x128xf32>
    %175 = arith.subf %158, %174 : vector<32x128xf32>
    %cst_83 = arith.constant 9.99999997E-7 : f32
    %176 = vector.broadcast %cst_83 : f32 to vector<32x1xf32>
    %177 = arith.addf %173, %176 : vector<32x1xf32>
    %178 = math.rsqrt %177 : vector<32x1xf32>
    %179 = vector.broadcast %178 : vector<32x1xf32> to vector<32x128xf32>
    %180 = arith.mulf %175, %179 : vector<32x128xf32>
    %181 = vector.broadcast %160 : vector<1x128xf32> to vector<32x128xf32>
    %182 = arith.mulf %180, %181 : vector<32x128xf32>
    %183 = vector.broadcast %162 : vector<1x128xf32> to vector<32x128xf32>
    %184 = arith.addf %182, %183 : vector<32x128xf32>
    %185 = vector.shape_cast %184 : vector<32x128xf32> to vector<2x16x128xf32>
    %c0_84 = arith.constant 0 : index
    %c0_85 = arith.constant 0 : index
    %c0_86 = arith.constant 0 : index
    %186 = vector.load %arg18[%c0_84, %c0_85, %c0_86] : memref<2x16x128xf32, #tpu.memory_space<vmem>>, vector<2x16x128xf32>
    tpu.vector_store %arg18[%c0_84, %c0_85, %c0_86], %185 {strides = array<i32>} : memref<2x16x128xf32, #tpu.memory_space<vmem>>, vector<2x16x128xf32>,
    return
  }
  func.func @transform_0(%arg0: i32) -> (i32, i32, i32) {
    %c0_i32 = arith.constant 0 : i32
    %c0_i32_0 = arith.constant 0 : i32
    %c0_i32_1 = arith.constant 0 : i32
    %c0_i32_2 = arith.constant 0 : i32
    return %c0_i32, %c0_i32_0, %c0_i32_1 : i32, i32, i32
  }
  func.func @transform_1(%arg0: i32) -> (i32, i32) {
    %c0_i32 = arith.constant 0 : i32
    %c0_i32_0 = arith.constant 0 : i32
    %c0_i32_1 = arith.constant 0 : i32
    return %c0_i32, %c0_i32_0 : i32, i32
  }
  func.func @transform_2(%arg0: i32) -> (i32, i32) {
    %c0_i32 = arith.constant 0 : i32
    %c0_i32_0 = arith.constant 0 : i32
    %c0_i32_1 = arith.constant 0 : i32
    return %c0_i32, %c0_i32_0 : i32, i32
  }
  func.func @transform_3(%arg0: i32) -> (i32, i32) {
    %c0_i32 = arith.constant 0 : i32
    %c0_i32_0 = arith.constant 0 : i32
    %c0_i32_1 = arith.constant 0 : i32
    return %c0_i32, %c0_i32_0 : i32, i32
  }
  func.func @transform_4(%arg0: i32) -> (i32, i32, i32) {
    %c0_i32 = arith.constant 0 : i32
    %c0_i32_0 = arith.constant 0 : i32
    %c0_i32_1 = arith.constant 0 : i32
    %c0_i32_2 = arith.constant 0 : i32
    return %c0_i32, %c0_i32_0, %c0_i32_1 : i32, i32, i32
  }
  func.func @transform_5(%arg0: i32) -> (i32, i32, i32) {
    %c0_i32 = arith.constant 0 : i32
    %c0_i32_0 = arith.constant 0 : i32
    %c0_i32_1 = arith.constant 0 : i32
    return %arg0, %c0_i32, %c0_i32_0 : i32, i32, i32
  }
  func.func @transform_6(%arg0: i32) -> (i32, i32, i32) {
    %c0_i32 = arith.constant 0 : i32
    %c0_i32_0 = arith.constant 0 : i32
    %c0_i32_1 = arith.constant 0 : i32
    return %arg0, %c0_i32, %c0_i32_0 : i32, i32, i32
  }
  func.func @transform_7(%arg0: i32) -> (i32, i32, i32) {
    %c0_i32 = arith.constant 0 : i32
    %c0_i32_0 = arith.constant 0 : i32
    %c0_i32_1 = arith.constant 0 : i32
    return %arg0, %c0_i32, %c0_i32_0 : i32, i32, i32
  }
  func.func @transform_8(%arg0: i32) -> (i32, i32, i32) {
    %c0_i32 = arith.constant 0 : i32
    %c0_i32_0 = arith.constant 0 : i32
    %c0_i32_1 = arith.constant 0 : i32
    return %arg0, %c0_i32, %c0_i32_0 : i32, i32, i32
  }
  func.func @transform_9(%arg0: i32) -> (i32, i32, i32) {
    %c0_i32 = arith.constant 0 : i32
    %c0_i32_0 = arith.constant 0 : i32
    %c0_i32_1 = arith.constant 0 : i32
    return %arg0, %c0_i32, %c0_i32_0 : i32, i32, i32
  }
  func.func @transform_10(%arg0: i32) -> (i32, i32, i32) {
    %c0_i32 = arith.constant 0 : i32
    %c0_i32_0 = arith.constant 0 : i32
    %c0_i32_1 = arith.constant 0 : i32
    return %arg0, %c0_i32, %c0_i32_0 : i32, i32, i32
  }
  func.func @transform_11(%arg0: i32) -> (i32, i32, i32) {
    %c0_i32 = arith.constant 0 : i32
    %c0_i32_0 = arith.constant 0 : i32
    %c0_i32_1 = arith.constant 0 : i32
    return %arg0, %c0_i32, %c0_i32_0 : i32, i32, i32
  }
  func.func @transform_12(%arg0: i32) -> (i32, i32, i32) {
    %c0_i32 = arith.constant 0 : i32
    %c0_i32_0 = arith.constant 0 : i32
    %c0_i32_1 = arith.constant 0 : i32
    return %arg0, %c0_i32, %c0_i32_0 : i32, i32, i32
  }
  func.func @transform_13(%arg0: i32) -> (i32, i32, i32) {
    %c0_i32 = arith.constant 0 : i32
    %c0_i32_0 = arith.constant 0 : i32
    %c0_i32_1 = arith.constant 0 : i32
    return %arg0, %c0_i32, %c0_i32_0 : i32, i32, i32
  }
  func.func @transform_14(%arg0: i32) -> (i32, i32, i32) {
    %c0_i32 = arith.constant 0 : i32
    %c0_i32_0 = arith.constant 0 : i32
    %c0_i32_1 = arith.constant 0 : i32
    return %arg0, %c0_i32, %c0_i32_0 : i32, i32, i32
  }
  func.func @transform_15(%arg0: i32) -> (i32, i32, i32) {
    %c0_i32 = arith.constant 0 : i32
    %c0_i32_0 = arith.constant 0 : i32
    %c0_i32_1 = arith.constant 0 : i32
    return %arg0, %c0_i32, %c0_i32_0 : i32, i32, i32
  }
  func.func @transform_16(%arg0: i32) -> (i32, i32, i32) {
    %c0_i32 = arith.constant 0 : i32
    %c0_i32_0 = arith.constant 0 : i32
    %c0_i32_1 = arith.constant 0 : i32
    return %arg0, %c0_i32, %c0_i32_0 : i32, i32, i32
  }
  func.func @transform_17(%arg0: i32) -> (i32, i32, i32) {
    %c0_i32 = arith.constant 0 : i32
    %c0_i32_0 = arith.constant 0 : i32
    %c0_i32_1 = arith.constant 0 : i32
    %c0_i32_2 = arith.constant 0 : i32
    return %c0_i32, %c0_i32_0, %c0_i32_1 : i32, i32, i32
  }
}

</mosaic_0001>

<llo_original>
// kernel: tpu_custom_call.1
$region0: #{tpu_custom_call.1}
  #allocation0 [shape = 'u32[]', space=smem, size = 0x4, offset = 0x4, fixed_abs, tag = 'smem constant byte address 0x4 - core index']
  #allocation1 [shape = 'u32[72,128]{1,0:T(1,128)}', space=vmem, size = 0x9000, scoped, tag = 'internal scratch']
  %s0 = inlined_call_operand.hbm [shape: f32[2,16,80], index: 0, kind: input, shape index: {}]
  %s1 = inlined_call_operand.hbm [shape: f32[80,128], index: 1, kind: input, shape index: {}]
  %s2 = inlined_call_operand.hbm [shape: f32[1,128], index: 2, kind: input, shape index: {}]
  %s3 = inlined_call_operand.hbm [shape: f32[16,128], index: 3, kind: input, shape index: {}]
  %s4 = inlined_call_operand.vmem [shape: f32[2,1,16], index: 4, kind: input, shape index: {}]
  %s5 = inlined_call_operand.hbm [shape: f32[2,128,384], index: 5, kind: input, shape index: {}]
  %s6 = inlined_call_operand.hbm [shape: f32[2,1,384], index: 6, kind: input, shape index: {}]
  %s7 = inlined_call_operand.hbm [shape: f32[2,128,128], index: 7, kind: input, shape index: {}]
  %s8 = inlined_call_operand.hbm [shape: f32[2,1,128], index: 8, kind: input, shape index: {}]
  %s9 = inlined_call_operand.vmem [shape: f32[2,1,128], index: 9, kind: input, shape index: {}]
  %s10 = inlined_call_operand.hbm [shape: f32[2,1,128], index: 10, kind: input, shape index: {}]
  %s11 = inlined_call_operand.hbm [shape: f32[2,128,256], index: 11, kind: input, shape index: {}]
  %s12 = inlined_call_operand.vmem [shape: f32[2,1,256], index: 12, kind: input, shape index: {}]
  %s13 = inlined_call_operand.hbm [shape: f32[2,256,128], index: 13, kind: input, shape index: {}]
  %s14 = inlined_call_operand.vmem [shape: f32[2,1,128], index: 14, kind: input, shape index: {}]
  %s15 = inlined_call_operand.vmem [shape: f32[2,1,128], index: 15, kind: input, shape index: {}]
  %s16 = inlined_call_operand.vmem [shape: f32[2,1,128], index: 16, kind: input, shape index: {}]
  %s17 = inlined_call_operand.hbm [shape: f32[2,16,128], index: 17, kind: output, shape index: {}]
  %s18 = sld [smem:[#allocation0]]
  $region149: #{tpu_custom_call.1} parent=0
    _
  %s20 = ssub.s32 1, %s18
  %s21 = scalar_select 0, %s20, %s18
  $region1: #{tpu_custom_call.1} parent=0
    #allocation2 [shape = 'u8[16384]{0}', space=vmem, size = 0x4000, scoped, tag = 'input window, operand 0, single buffered']
    #allocation3 [shape = 's32[2]{0}', space=sflag, size = 0x8, scoped, tag = 'scoped memory for tpu_custom_call.1']
    #allocation4 [shape = 's32[2]{0}', space=sflag, size = 0x8, scoped, tag = 'scoped memory for tpu_custom_call.1']
    #allocation5 [shape = 'u8[40960]{0}', space=vmem, size = 0xa000, scoped, tag = 'input window, operand 1, single buffered']
    #allocation6 [shape = 's32[1]{0}', space=sflag, size = 0x4, scoped, tag = 'scoped memory for tpu_custom_call.1']
    #allocation7 [shape = 'u8[512]{0}', space=vmem, size = 0x400, scoped, tag = 'input window, operand 2, single buffered']
    #allocation8 [shape = 'u8[8192]{0}', space=vmem, size = 0x2000, scoped, tag = 'input window, operand 3, single buffered']
    #allocation9 [shape = 's32[1]{0}', space=sflag, size = 0x4, scoped, tag = 'scoped memory for tpu_custom_call.1']
    #allocation10 [shape = 'u8[393216]{0}', space=vmem, size = 0x60000, scoped, tag = 'input window, operand 5']
    #allocation11 [shape = 'u8[3072]{0}', space=vmem, size = 0xc00, scoped, tag = 'input window, operand 6']
    #allocation12 [shape = 'u8[131072]{0}', space=vmem, size = 0x20000, scoped, tag = 'input window, operand 7']
    #allocation13 [shape = 'u8[1024]{0}', space=vmem, size = 0x400, scoped, tag = 'input window, operand 8']
    #allocation14 [shape = 'u8[1024]{0}', space=vmem, size = 0x400, scoped, tag = 'input window, operand 10']
    #allocation15 [shape = 'u8[262144]{0}', space=vmem, size = 0x40000, scoped, tag = 'input window, operand 11']
    #allocation16 [shape = 'u8[262144]{0}', space=vmem, size = 0x40000, scoped, tag = 'input window, operand 13']
    #allocation17 [shape = 'u8[16384]{0}', space=vmem, size = 0x4000, scoped, tag = 'output window, operand 0, single buffered']
    %22 = vsyncpa [#allocation3], 0
    %23 = vsyncpa [#allocation6], 0
    %24 = vsyncpa [#allocation9], 0
    %25 = vsyncpa [#allocation4], 0
    loop: start=0, step=1, limit=4
    $region2: #{tpu_custom_call.1} parent=1 // loop_pre_header
      _
    $region3: #{tpu_custom_call.1} parent=1 // loop_header
      %s27 = sphi 0, %s31
      %p28 = scmp.ge.s32.totalorder %s27, 4
      %s35 = sphi 0, %s35
      %s37 = sphi 0, %s35
      %s38 = sphi 0, %s37
      %s52 = sphi 0, %s38
      %s56 = sphi 0, %s56
      %s58 = sphi 0, %s56
      %s59 = sphi 0, %s58
      %s73 = sphi 0, %s59
      %s77 = sphi 0, %s77
      %s79 = sphi 0, %s77
      %s80 = sphi 0, %s79
      %s94 = sphi 0, %s80
      %s98 = sphi 0, %s98
      %s100 = sphi 0, %s98
      %s101 = sphi 0, %s100
      %s115 = sphi 0, %s101
      %s119 = sphi 0, %s119
      %s121 = sphi 0, %s119
      %s122 = sphi 0, %s121
      %s136 = sphi 0, %s122
      %s142 = sphi 0, %s144
      %s145 = sphi 0, %s142
      %s146 = sphi 0, %s145
      %s162 = sphi 0, %s146
      %s168 = sphi 0, %s170
      %s171 = sphi 0, %s168
      %s172 = sphi 0, %s171
      %s188 = sphi 0, %s172
      %s194 = sphi 0, %s196
      %s197 = sphi 0, %s194
      %s198 = sphi 0, %s197
      %s214 = sphi 0, %s198
      %s220 = sphi 0, %s222
      %s223 = sphi 0, %s220
      %s224 = sphi 0, %s223
      %s240 = sphi 0, %s224
      %s246 = sphi 0, %s248
      %s249 = sphi 0, %s246
      %s250 = sphi 0, %s249
      %s266 = sphi 0, %s250
      %s272 = sphi 0, %s274
      %s275 = sphi 0, %s272
      %s276 = sphi 0, %s275
      %s292 = sphi 0, %s276
      %s298 = sphi 0, %s300
      %s301 = sphi 0, %s298
      %s302 = sphi 0, %s301
      %s318 = sphi 0, %s302
      %s324 = sphi 0, %s326
      %s327 = sphi 0, %s324
      %s328 = sphi 0, %s327
      %s344 = sphi 0, %s328
      %s350 = sphi 0, %s352
      %s353 = sphi 0, %s350
      %s354 = sphi 0, %s353
      %s370 = sphi 0, %s354
      %s376 = sphi 0, %s378
      %s379 = sphi 0, %s376
      %s380 = sphi 0, %s379
      %s396 = sphi 0, %s380
      %s402 = sphi 0, %s404
      %s405 = sphi 0, %s402
      %s406 = sphi 0, %s405
      %s422 = sphi 0, %s406
      %s428 = sphi 0, %s430
      %s431 = sphi 0, %s428
      %s432 = sphi 0, %s431
      %s448 = sphi 0, %s432
      %s452 = sphi 0, %s452
      %s454 = sphi 0, %s452
      %s455 = sphi 0, %s454
      %s469 = sphi 0, %s455
    $region4: #{tpu_custom_call.1} parent=1 // loop_header_branch
      %30 = sbr.rel (%p28) target = $region8
    $region5: #{tpu_custom_call.1} parent=1 // loop_body
      %s32 = ssub.s32 %s27, 1
      %s33 = ssub.s32 %s27, 2
      %s34 = sadd.s32 %s27, 1
      %s36 = sadd.s32 %s35, 1
      %p39 = scmp.eq.s32.totalorder %s27, 1
      %p40 = scmp.ne.s32.totalorder %s35, %s37
      %p41 = scmp.eq.s32.totalorder %s27, 0
      %p42 = por %p40, %p41
      %p43 = scmp.ne.s32.totalorder %s35, %s37
      %p44 = scmp.eq.s32.totalorder %s32, 1
      %p45 = por %p43, %p44
      %p46 = scmp.ne.s32.totalorder %s37, %s38
      %p47 = scmp.eq.s32.totalorder %s32, 0
      %p48 = por %p46, %p47
      %p49 = scmp.ne.s32.totalorder %s37, %s38
      %p50 = scmp.eq.s32.totalorder %s33, 1
      %p51 = por %p49, %p50
      %p53 = scmp.ne.s32.totalorder %s38, %s52
      %p54 = scmp.eq.s32.totalorder %s33, 0
      %p55 = por %p53, %p54
      %s57 = sadd.s32 %s56, 1
      %p60 = scmp.eq.s32.totalorder %s27, 1
      %p61 = scmp.ne.s32.totalorder %s56, %s58
      %p62 = scmp.eq.s32.totalorder %s27, 0
      %p63 = por %p61, %p62
      %p64 = scmp.ne.s32.totalorder %s56, %s58
      %p65 = scmp.eq.s32.totalorder %s32, 1
      %p66 = por %p64, %p65
      %p67 = scmp.ne.s32.totalorder %s58, %s59
      %p68 = scmp.eq.s32.totalorder %s32, 0
      %p69 = por %p67, %p68
      %p70 = scmp.ne.s32.totalorder %s58, %s59
      %p71 = scmp.eq.s32.totalorder %s33, 1
      %p72 = por %p70, %p71
      %p74 = scmp.ne.s32.totalorder %s59, %s73
      %p75 = scmp.eq.s32.totalorder %s33, 0
      %p76 = por %p74, %p75
      %s78 = sadd.s32 %s77, 1
      %p81 = scmp.eq.s32.totalorder %s27, 1
      %p82 = scmp.ne.s32.totalorder %s77, %s79
      %p83 = scmp.eq.s32.totalorder %s27, 0
      %p84 = por %p82, %p83
      %p85 = scmp.ne.s32.totalorder %s77, %s79
      %p86 = scmp.eq.s32.totalorder %s32, 1
      %p87 = por %p85, %p86
      %p88 = scmp.ne.s32.totalorder %s79, %s80
      %p89 = scmp.eq.s32.totalorder %s32, 0
      %p90 = por %p88, %p89
      %p91 = scmp.ne.s32.totalorder %s79, %s80
      %p92 = scmp.eq.s32.totalorder %s33, 1
      %p93 = por %p91, %p92
      %p95 = scmp.ne.s32.totalorder %s80, %s94
      %p96 = scmp.eq.s32.totalorder %s33, 0
      %p97 = por %p95, %p96
      %s99 = sadd.s32 %s98, 1
      %p102 = scmp.eq.s32.totalorder %s27, 1
      %p103 = scmp.ne.s32.totalorder %s98, %s100
      %p104 = scmp.eq.s32.totalorder %s27, 0
      %p105 = por %p103, %p104
      %p106 = scmp.ne.s32.totalorder %s98, %s100
      %p107 = scmp.eq.s32.totalorder %s32, 1
      %p108 = por %p106, %p107
      %p109 = scmp.ne.s32.totalorder %s100, %s101
      %p110 = scmp.eq.s32.totalorder %s32, 0
      %p111 = por %p109, %p110
      %p112 = scmp.ne.s32.totalorder %s100, %s101
      %p113 = scmp.eq.s32.totalorder %s33, 1
      %p114 = por %p112, %p113
      %p116 = scmp.ne.s32.totalorder %s101, %s115
      %p117 = scmp.eq.s32.totalorder %s33, 0
      %p118 = por %p116, %p117
      %s120 = sadd.s32 %s119, 1
      %p123 = scmp.eq.s32.totalorder %s27, 1
      %p124 = scmp.ne.s32.totalorder %s119, %s121
      %p125 = scmp.eq.s32.totalorder %s27, 0
      %p126 = por %p124, %p125
      %p127 = scmp.ne.s32.totalorder %s119, %s121
      %p128 = scmp.eq.s32.totalorder %s32, 1
      %p129 = por %p127, %p128
      %p130 = scmp.ne.s32.totalorder %s121, %s122
      %p131 = scmp.eq.s32.totalorder %s32, 0
      %p132 = por %p130, %p131
      %p133 = scmp.ne.s32.totalorder %s121, %s122
      %p134 = scmp.eq.s32.totalorder %s33, 1
      %p135 = por %p133, %p134
      %p137 = scmp.ne.s32.totalorder %s122, %s136
      %p138 = scmp.eq.s32.totalorder %s33, 0
      %p139 = por %p137, %p138
      %s140 = ssub.s32 %s27, %s34
      %p141 = scmp.eq.s32.totalorder %s140, 0
      %s143 = sadd.s32 %s142, 1
      %s144 = scalar_select %p141, %s142, %s143
      %p147 = pneg %p141
      %p148 = scmp.eq.s32.totalorder %s27, 1
      %p149 = por %p147, %p148
      %p150 = scmp.ne.s32.totalorder %s142, %s145
      %p151 = scmp.eq.s32.totalorder %s27, 0
      %p152 = por %p150, %p151
      %p153 = scmp.ne.s32.totalorder %s142, %s145
      %p154 = scmp.eq.s32.totalorder %s32, 1
      %p155 = por %p153, %p154
      %p156 = scmp.ne.s32.totalorder %s145, %s146
      %p157 = scmp.eq.s32.totalorder %s32, 0
      %p158 = por %p156, %p157
      %p159 = scmp.ne.s32.totalorder %s145, %s146
      %p160 = scmp.eq.s32.totalorder %s33, 1
      %p161 = por %p159, %p160
      %p163 = scmp.ne.s32.totalorder %s146, %s162
      %p164 = scmp.eq.s32.totalorder %s33, 0
      %p165 = por %p163, %p164
      %s166 = ssub.s32 %s27, %s34
      %p167 = scmp.eq.s32.totalorder %s166, 0
      %s169 = sadd.s32 %s168, 1
      %s170 = scalar_select %p167, %s168, %s169
      %p173 = pneg %p167
      %p174 = scmp.eq.s32.totalorder %s27, 1
      %p175 = por %p173, %p174
      %p176 = scmp.ne.s32.totalorder %s168, %s171
      %p177 = scmp.eq.s32.totalorder %s27, 0
      %p178 = por %p176, %p177
      %p179 = scmp.ne.s32.totalorder %s168, %s171
      %p180 = scmp.eq.s32.totalorder %s32, 1
      %p181 = por %p179, %p180
      %p182 = scmp.ne.s32.totalorder %s171, %s172
      %p183 = scmp.eq.s32.totalorder %s32, 0
      %p184 = por %p182, %p183
      %p185 = scmp.ne.s32.totalorder %s171, %s172
      %p186 = scmp.eq.s32.totalorder %s33, 1
      %p187 = por %p185, %p186
      %p189 = scmp.ne.s32.totalorder %s172, %s188
      %p190 = scmp.eq.s32.totalorder %s33, 0
      %p191 = por %p189, %p190
      %s192 = ssub.s32 %s27, %s34
      %p193 = scmp.eq.s32.totalorder %s192, 0
      %s195 = sadd.s32 %s194, 1
      %s196 = scalar_select %p193, %s194, %s195
      %p199 = pneg %p193
      %p200 = scmp.eq.s32.totalorder %s27, 1
      %p201 = por %p199, %p200
      %p202 = scmp.ne.s32.totalorder %s194, %s197
      %p203 = scmp.eq.s32.totalorder %s27, 0
      %p204 = por %p202, %p203
      %p205 = scmp.ne.s32.totalorder %s194, %s197
      %p206 = scmp.eq.s32.totalorder %s32, 1
      %p207 = por %p205, %p206
      %p208 = scmp.ne.s32.totalorder %s197, %s198
      %p209 = scmp.eq.s32.totalorder %s32, 0
      %p210 = por %p208, %p209
      %p211 = scmp.ne.s32.totalorder %s197, %s198
      %p212 = scmp.eq.s32.totalorder %s33, 1
      %p213 = por %p211, %p212
      %p215 = scmp.ne.s32.totalorder %s198, %s214
      %p216 = scmp.eq.s32.totalorder %s33, 0
      %p217 = por %p215, %p216
      %s218 = ssub.s32 %s27, %s34
      %p219 = scmp.eq.s32.totalorder %s218, 0
      %s221 = sadd.s32 %s220, 1
      %s222 = scalar_select %p219, %s220, %s221
      %p225 = pneg %p219
      %p226 = scmp.eq.s32.totalorder %s27, 1
      %p227 = por %p225, %p226
      %p228 = scmp.ne.s32.totalorder %s220, %s223
      %p229 = scmp.eq.s32.totalorder %s27, 0
      %p230 = por %p228, %p229
      %p231 = scmp.ne.s32.totalorder %s220, %s223
      %p232 = scmp.eq.s32.totalorder %s32, 1
      %p233 = por %p231, %p232
      %p234 = scmp.ne.s32.totalorder %s223, %s224
      %p235 = scmp.eq.s32.totalorder %s32, 0
      %p236 = por %p234, %p235
      %p237 = scmp.ne.s32.totalorder %s223, %s224
      %p238 = scmp.eq.s32.totalorder %s33, 1
      %p239 = por %p237, %p238
      %p241 = scmp.ne.s32.totalorder %s224, %s240
      %p242 = scmp.eq.s32.totalorder %s33, 0
      %p243 = por %p241, %p242
      %s244 = ssub.s32 %s27, %s34
      %p245 = scmp.eq.s32.totalorder %s244, 0
      %s247 = sadd.s32 %s246, 1
      %s248 = scalar_select %p245, %s246, %s247
      %p251 = pneg %p245
      %p252 = scmp.eq.s32.totalorder %s27, 1
      %p253 = por %p251, %p252
      %p254 = scmp.ne.s32.totalorder %s246, %s249
      %p255 = scmp.eq.s32.totalorder %s27, 0
      %p256 = por %p254, %p255
      %p257 = scmp.ne.s32.totalorder %s246, %s249
      %p258 = scmp.eq.s32.totalorder %s32, 1
      %p259 = por %p257, %p258
      %p260 = scmp.ne.s32.totalorder %s249, %s250
      %p261 = scmp.eq.s32.totalorder %s32, 0
      %p262 = por %p260, %p261
      %p263 = scmp.ne.s32.totalorder %s249, %s250
      %p264 = scmp.eq.s32.totalorder %s33, 1
      %p265 = por %p263, %p264
      %p267 = scmp.ne.s32.totalorder %s250, %s266
      %p268 = scmp.eq.s32.totalorder %s33, 0
      %p269 = por %p267, %p268
      %s270 = ssub.s32 %s27, %s34
      %p271 = scmp.eq.s32.totalorder %s270, 0
      %s273 = sadd.s32 %s272, 1
      %s274 = scalar_select %p271, %s272, %s273
      %p277 = pneg %p271
      %p278 = scmp.eq.s32.totalorder %s27, 1
      %p279 = por %p277, %p278
      %p280 = scmp.ne.s32.totalorder %s272, %s275
      %p281 = scmp.eq.s32.totalorder %s27, 0
      %p282 = por %p280, %p281
      %p283 = scmp.ne.s32.totalorder %s272, %s275
      %p284 = scmp.eq.s32.totalorder %s32, 1
      %p285 = por %p283, %p284
      %p286 = scmp.ne.s32.totalorder %s275, %s276
      %p287 = scmp.eq.s32.totalorder %s32, 0
      %p288 = por %p286, %p287
      %p289 = scmp.ne.s32.totalorder %s275, %s276
      %p290 = scmp.eq.s32.totalorder %s33, 1
      %p291 = por %p289, %p290
      %p293 = scmp.ne.s32.totalorder %s276, %s292
      %p294 = scmp.eq.s32.totalorder %s33, 0
      %p295 = por %p293, %p294
      %s296 = ssub.s32 %s27, %s34
      %p297 = scmp.eq.s32.totalorder %s296, 0
      %s299 = sadd.s32 %s298, 1
      %s300 = scalar_select %p297, %s298, %s299
      %p303 = pneg %p297
      %p304 = scmp.eq.s32.totalorder %s27, 1
      %p305 = por %p303, %p304
      %p306 = scmp.ne.s32.totalorder %s298, %s301
      %p307 = scmp.eq.s32.totalorder %s27, 0
      %p308 = por %p306, %p307
      %p309 = scmp.ne.s32.totalorder %s298, %s301
      %p310 = scmp.eq.s32.totalorder %s32, 1
      %p311 = por %p309, %p310
      %p312 = scmp.ne.s32.totalorder %s301, %s302
      %p313 = scmp.eq.s32.totalorder %s32, 0
      %p314 = por %p312, %p313
      %p315 = scmp.ne.s32.totalorder %s301, %s302
      %p316 = scmp.eq.s32.totalorder %s33, 1
      %p317 = por %p315, %p316
      %p319 = scmp.ne.s32.totalorder %s302, %s318
      %p320 = scmp.eq.s32.totalorder %s33, 0
      %p321 = por %p319, %p320
      %s322 = ssub.s32 %s27, %s34
      %p323 = scmp.eq.s32.totalorder %s322, 0
      %s325 = sadd.s32 %s324, 1
      %s326 = scalar_select %p323, %s324, %s325
      %p329 = pneg %p323
      %p330 = scmp.eq.s32.totalorder %s27, 1
      %p331 = por %p329, %p330
      %p332 = scmp.ne.s32.totalorder %s324, %s327
      %p333 = scmp.eq.s32.totalorder %s27, 0
      %p334 = por %p332, %p333
      %p335 = scmp.ne.s32.totalorder %s324, %s327
      %p336 = scmp.eq.s32.totalorder %s32, 1
      %p337 = por %p335, %p336
      %p338 = scmp.ne.s32.totalorder %s327, %s328
      %p339 = scmp.eq.s32.totalorder %s32, 0
      %p340 = por %p338, %p339
      %p341 = scmp.ne.s32.totalorder %s327, %s328
      %p342 = scmp.eq.s32.totalorder %s33, 1
      %p343 = por %p341, %p342
      %p345 = scmp.ne.s32.totalorder %s328, %s344
      %p346 = scmp.eq.s32.totalorder %s33, 0
      %p347 = por %p345, %p346
      %s348 = ssub.s32 %s27, %s34
      %p349 = scmp.eq.s32.totalorder %s348, 0
      %s351 = sadd.s32 %s350, 1
      %s352 = scalar_select %p349, %s350, %s351
      %p355 = pneg %p349
      %p356 = scmp.eq.s32.totalorder %s27, 1
      %p357 = por %p355, %p356
      %p358 = scmp.ne.s32.totalorder %s350, %s353
      %p359 = scmp.eq.s32.totalorder %s27, 0
      %p360 = por %p358, %p359
      %p361 = scmp.ne.s32.totalorder %s350, %s353
      %p362 = scmp.eq.s32.totalorder %s32, 1
      %p363 = por %p361, %p362
      %p364 = scmp.ne.s32.totalorder %s353, %s354
      %p365 = scmp.eq.s32.totalorder %s32, 0
      %p366 = por %p364, %p365
      %p367 = scmp.ne.s32.totalorder %s353, %s354
      %p368 = scmp.eq.s32.totalorder %s33, 1
      %p369 = por %p367, %p368
      %p371 = scmp.ne.s32.totalorder %s354, %s370
      %p372 = scmp.eq.s32.totalorder %s33, 0
      %p373 = por %p371, %p372
      %s374 = ssub.s32 %s27, %s34
      %p375 = scmp.eq.s32.totalorder %s374, 0
      %s377 = sadd.s32 %s376, 1
      %s378 = scalar_select %p375, %s376, %s377
      %p381 = pneg %p375
      %p382 = scmp.eq.s32.totalorder %s27, 1
      %p383 = por %p381, %p382
      %p384 = scmp.ne.s32.totalorder %s376, %s379
      %p385 = scmp.eq.s32.totalorder %s27, 0
      %p386 = por %p384, %p385
      %p387 = scmp.ne.s32.totalorder %s376, %s379
      %p388 = scmp.eq.s32.totalorder %s32, 1
      %p389 = por %p387, %p388
      %p390 = scmp.ne.s32.totalorder %s379, %s380
      %p391 = scmp.eq.s32.totalorder %s32, 0
      %p392 = por %p390, %p391
      %p393 = scmp.ne.s32.totalorder %s379, %s380
      %p394 = scmp.eq.s32.totalorder %s33, 1
      %p395 = por %p393, %p394
      %p397 = scmp.ne.s32.totalorder %s380, %s396
      %p398 = scmp.eq.s32.totalorder %s33, 0
      %p399 = por %p397, %p398
      %s400 = ssub.s32 %s27, %s34
      %p401 = scmp.eq.s32.totalorder %s400, 0
      %s403 = sadd.s32 %s402, 1
      %s404 = scalar_select %p401, %s402, %s403
      %p407 = pneg %p401
      %p408 = scmp.eq.s32.totalorder %s27, 1
      %p409 = por %p407, %p408
      %p410 = scmp.ne.s32.totalorder %s402, %s405
      %p411 = scmp.eq.s32.totalorder %s27, 0
      %p412 = por %p410, %p411
      %p413 = scmp.ne.s32.totalorder %s402, %s405
      %p414 = scmp.eq.s32.totalorder %s32, 1
      %p415 = por %p413, %p414
      %p416 = scmp.ne.s32.totalorder %s405, %s406
      %p417 = scmp.eq.s32.totalorder %s32, 0
      %p418 = por %p416, %p417
      %p419 = scmp.ne.s32.totalorder %s405, %s406
      %p420 = scmp.eq.s32.totalorder %s33, 1
      %p421 = por %p419, %p420
      %p423 = scmp.ne.s32.totalorder %s406, %s422
      %p424 = scmp.eq.s32.totalorder %s33, 0
      %p425 = por %p423, %p424
      %s426 = ssub.s32 %s27, %s34
      %p427 = scmp.eq.s32.totalorder %s426, 0
      %s429 = sadd.s32 %s428, 1
      %s430 = scalar_select %p427, %s428, %s429
      %p433 = pneg %p427
      %p434 = scmp.eq.s32.totalorder %s27, 1
      %p435 = por %p433, %p434
      %p436 = scmp.ne.s32.totalorder %s428, %s431
      %p437 = scmp.eq.s32.totalorder %s27, 0
      %p438 = por %p436, %p437
      %p439 = scmp.ne.s32.totalorder %s428, %s431
      %p440 = scmp.eq.s32.totalorder %s32, 1
      %p441 = por %p439, %p440
      %p442 = scmp.ne.s32.totalorder %s431, %s432
      %p443 = scmp.eq.s32.totalorder %s32, 0
      %p444 = por %p442, %p443
      %p445 = scmp.ne.s32.totalorder %s431, %s432
      %p446 = scmp.eq.s32.totalorder %s33, 1
      %p447 = por %p445, %p446
      %p449 = scmp.ne.s32.totalorder %s432, %s448
      %p450 = scmp.eq.s32.totalorder %s33, 0
      %p451 = por %p449, %p450
      %s453 = sadd.s32 %s452, 1
      %p456 = scmp.eq.s32.totalorder %s27, 1
      %p457 = scmp.ne.s32.totalorder %s452, %s454
      %p458 = scmp.eq.s32.totalorder %s27, 0
      %p459 = por %p457, %p458
      %p460 = scmp.ne.s32.totalorder %s452, %s454
      %p461 = scmp.eq.s32.totalorder %s32, 1
      %p462 = por %p460, %p461
      %p463 = scmp.ne.s32.totalorder %s454, %s455
      %p464 = scmp.eq.s32.totalorder %s32, 0
      %p465 = por %p463, %p464
      %p466 = scmp.ne.s32.totalorder %s454, %s455
      %p467 = scmp.eq.s32.totalorder %s33, 1
      %p468 = por %p466, %p467
      %p470 = scmp.ne.s32.totalorder %s455, %s469
      %p471 = scmp.eq.s32.totalorder %s33, 0
      %p472 = por %p470, %p471
      %p473 = scmp.le.s32.totalorder 1, %s27
      %p474 = scmp.lt.s32.totalorder %s27, 3
      %p475 = pnand %p473, %p474
      %p476 = pneg %p475
      // Predicated region
      $region9: #{tpu_custom_call.1} parent=5 // pred_check
        _
      $region10: #{tpu_custom_call.1} parent=5 // pred_check_branch
        %478 = sbr.rel (%p475) target = $region12
      $region11: #{tpu_custom_call.1} parent=5 // pred_region
        %s479 = ssub.s32 %s27, 1
        // Predicated region
        $region13: #{tpu_custom_call.1} parent=11 // pred_check
          %p480 = pneg %p48
        $region14: #{tpu_custom_call.1} parent=11 // pred_check_branch
          %482 = sbr.rel (%p480) target = $region16
        $region15: #{tpu_custom_call.1} parent=11 // pred_region
          %484 = vsyncadd [#allocation3], 0
          %s485 = sshll.u32 %s0, 4
          %s486 = int_to_ptr.hbm [resolvable:$true] %s485
          %s487 = sshll.u32 [#allocation2], 4
          %s488 = int_to_ptr.vmem [resolvable:$true] %s487
          %493 = dma.hbm_to_vmem [thread:$0]  %s486, 512, %s488, [#allocation3], 128, 128, 8
        $region16: #{tpu_custom_call.1} parent=11 // pred_fallthru
          _
        // Predicated region
        $region17: #{tpu_custom_call.1} parent=11 // pred_check
          %p494 = pneg %p69
        $region18: #{tpu_custom_call.1} parent=11 // pred_check_branch
          %496 = sbr.rel (%p494) target = $region20
        $region19: #{tpu_custom_call.1} parent=11 // pred_region
          %498 = vsyncadd [#allocation6], 0
          %s499 = sshll.u32 %s1, 4
          %s500 = int_to_ptr.hbm [resolvable:$true] %s499
          %s501 = sshll.u32 [#allocation5], 4
          %s502 = int_to_ptr.vmem [resolvable:$true] %s501
          %507 = dma.hbm_to_vmem [thread:$0]  %s500, 1280, %s502, [#allocation6], 128, 128, 8
        $region20: #{tpu_custom_call.1} parent=11 // pred_fallthru
          _
        // Predicated region
        $region21: #{tpu_custom_call.1} parent=11 // pred_check
          %p508 = pneg %p90
        $region22: #{tpu_custom_call.1} parent=11 // pred_check_branch
          %510 = sbr.rel (%p508) target = $region24
        $region23: #{tpu_custom_call.1} parent=11 // pred_region
          %512 = vsyncadd [#allocation6], 0
          %s514 = sshll.u32 %s2, 4
          %s515 = int_to_ptr.hbm [resolvable:$true] %s514
          %s516 = sshll.u32 [#allocation7], 4
          %s517 = int_to_ptr.vmem [resolvable:$true] %s516
          %519 = dma.hbm_to_vmem [thread:$0]  %s515, 16, %s517, [#allocation6]
        $region24: #{tpu_custom_call.1} parent=11 // pred_fallthru
          _
        // Predicated region
        $region25: #{tpu_custom_call.1} parent=11 // pred_check
          %p520 = pneg %p111
        $region26: #{tpu_custom_call.1} parent=11 // pred_check_branch
          %522 = sbr.rel (%p520) target = $region28
        $region27: #{tpu_custom_call.1} parent=11 // pred_region
          %524 = vsyncadd [#allocation9], 0
          %s525 = sshll.u32 %s3, 4
          %s526 = int_to_ptr.hbm [resolvable:$true] %s525
          %s527 = sshll.u32 [#allocation8], 4
          %s528 = int_to_ptr.vmem [resolvable:$true] %s527
          %533 = dma.hbm_to_vmem [thread:$0]  %s526, 256, %s528, [#allocation9], 128, 128, 8
        $region28: #{tpu_custom_call.1} parent=11 // pred_fallthru
          _
        // Predicated region
        $region29: #{tpu_custom_call.1} parent=11 // pred_check
          %p534 = pneg %p132
        $region30: #{tpu_custom_call.1} parent=11 // pred_check_branch
          %536 = sbr.rel (%p534) target = $region32
        $region31: #{tpu_custom_call.1} parent=11 // pred_region
          _
        $region32: #{tpu_custom_call.1} parent=11 // pred_fallthru
          _
      $region12: #{tpu_custom_call.1} parent=5 // pred_fallthru
        _
      %p537 = scmp.lt.s32.totalorder %s27, 2
      // Predicated region
      $region33: #{tpu_custom_call.1} parent=5 // pred_check
        %p538 = pneg %p537
      $region34: #{tpu_custom_call.1} parent=5 // pred_check_branch
        %540 = sbr.rel (%p538) target = $region36
      $region35: #{tpu_custom_call.1} parent=5 // pred_region
        // Predicated region
        $region37: #{tpu_custom_call.1} parent=35 // pred_check
          %p541 = pneg %p152
        $region38: #{tpu_custom_call.1} parent=35 // pred_check_branch
          %543 = sbr.rel (%p541) target = $region40
        $region39: #{tpu_custom_call.1} parent=35 // pred_region
          %s544 = sand.u32 %s27, 1
          %s545 = scalar_lea.sflag [#allocation3], %s544
          %s546 = sand.u32 %s142, 1
          %s547 = smul.addr %s546, 384
          %s548 = scalar_lea.vmem [#allocation10], %s547
          %550 = vsyncadd %s545, 0
          %s551 = smul.addr %s27, 48
          %s552 = smul.addr %s551, 8
          %s553 = scalar_lea.hbm %s5, %s552
          %s554 = sshll.u32 %s553, 4
          %s555 = int_to_ptr.hbm [resolvable:$true] %s554
          %s556 = sshll.u32 %s548, 4
          %s557 = int_to_ptr.vmem [resolvable:$true] %s556
          %562 = dma.hbm_to_vmem [thread:$0]  %s555, 6144, %s557, %s545, 384, 384, 24
        $region40: #{tpu_custom_call.1} parent=35 // pred_fallthru
          _
        // Predicated region
        $region41: #{tpu_custom_call.1} parent=35 // pred_check
          %p563 = pneg %p178
        $region42: #{tpu_custom_call.1} parent=35 // pred_check_branch
          %565 = sbr.rel (%p563) target = $region44
        $region43: #{tpu_custom_call.1} parent=35 // pred_region
          %s566 = sand.u32 %s27, 1
          %s567 = scalar_lea.sflag [#allocation3], %s566
          %s568 = sand.u32 %s168, 1
          %s569 = smul.addr %s568, 3
          %s570 = scalar_lea.vmem [#allocation11], %s569
          %572 = vsyncadd %s567, 0
          %s573 = smul.addr %s27, 3
          %s574 = scalar_lea.hbm %s6, %s573
          %s576 = sshll.u32 %s574, 4
          %s577 = int_to_ptr.hbm [resolvable:$true] %s576
          %s578 = sshll.u32 %s570, 4
          %s579 = int_to_ptr.vmem [resolvable:$true] %s578
          %581 = dma.hbm_to_vmem [thread:$0]  %s577, 48, %s579, %s567
        $region44: #{tpu_custom_call.1} parent=35 // pred_fallthru
          _
        // Predicated region
        $region45: #{tpu_custom_call.1} parent=35 // pred_check
          %p582 = pneg %p204
        $region46: #{tpu_custom_call.1} parent=35 // pred_check_branch
          %584 = sbr.rel (%p582) target = $region48
        $region47: #{tpu_custom_call.1} parent=35 // pred_region
          %s585 = sand.u32 %s27, 1
          %s586 = scalar_lea.sflag [#allocation3], %s585
          %s587 = sand.u32 %s194, 1
          %s588 = smul.addr %s587, 128
          %s589 = scalar_lea.vmem [#allocation12], %s588
          %591 = vsyncadd %s586, 0
          %s592 = smul.addr %s27, 16
          %s593 = smul.addr %s592, 8
          %s594 = scalar_lea.hbm %s7, %s593
          %s595 = sshll.u32 %s594, 4
          %s596 = int_to_ptr.hbm [resolvable:$true] %s595
          %s597 = sshll.u32 %s589, 4
          %s598 = int_to_ptr.vmem [resolvable:$true] %s597
          %603 = dma.hbm_to_vmem [thread:$0]  %s596, 2048, %s598, %s586, 128, 128, 8
        $region48: #{tpu_custom_call.1} parent=35 // pred_fallthru
          _
        // Predicated region
        $region49: #{tpu_custom_call.1} parent=35 // pred_check
          %p604 = pneg %p230
        $region50: #{tpu_custom_call.1} parent=35 // pred_check_branch
          %606 = sbr.rel (%p604) target = $region52
        $region51: #{tpu_custom_call.1} parent=35 // pred_region
          %s607 = sand.u32 %s27, 1
          %s608 = scalar_lea.sflag [#allocation3], %s607
          %s609 = sand.u32 %s220, 1
          %s610 = scalar_lea.vmem [#allocation13], %s609
          %612 = vsyncadd %s608, 0
          %s613 = scalar_lea.hbm %s8, %s27
          %s615 = sshll.u32 %s613, 4
          %s616 = int_to_ptr.hbm [resolvable:$true] %s615
          %s617 = sshll.u32 %s610, 4
          %s618 = int_to_ptr.vmem [resolvable:$true] %s617
          %620 = dma.hbm_to_vmem [thread:$0]  %s616, 16, %s618, %s608
        $region52: #{tpu_custom_call.1} parent=35 // pred_fallthru
          _
        // Predicated region
        $region53: #{tpu_custom_call.1} parent=35 // pred_check
          %p621 = pneg %p256
        $region54: #{tpu_custom_call.1} parent=35 // pred_check_branch
          %623 = sbr.rel (%p621) target = $region56
        $region55: #{tpu_custom_call.1} parent=35 // pred_region
          %p624 = scmp.lt.s32.totalorder %s27, 1
          %s625 = scalar_select %p624, %s27, 1
          %s626 = scalar_lea.vmem %s9, %s625
        $region56: #{tpu_custom_call.1} parent=35 // pred_fallthru
          _
        // Predicated region
        $region57: #{tpu_custom_call.1} parent=35 // pred_check
          %p627 = pneg %p282
        $region58: #{tpu_custom_call.1} parent=35 // pred_check_branch
          %629 = sbr.rel (%p627) target = $region60
        $region59: #{tpu_custom_call.1} parent=35 // pred_region
          %s630 = sand.u32 %s27, 1
          %s631 = scalar_lea.sflag [#allocation3], %s630
          %s632 = sand.u32 %s272, 1
          %s633 = scalar_lea.vmem [#allocation14], %s632
          %635 = vsyncadd %s631, 0
          %s636 = scalar_lea.hbm %s10, %s27
          %s638 = sshll.u32 %s636, 4
          %s639 = int_to_ptr.hbm [resolvable:$true] %s638
          %s640 = sshll.u32 %s633, 4
          %s641 = int_to_ptr.vmem [resolvable:$true] %s640
          %643 = dma.hbm_to_vmem [thread:$0]  %s639, 16, %s641, %s631
        $region60: #{tpu_custom_call.1} parent=35 // pred_fallthru
          _
        // Predicated region
        $region61: #{tpu_custom_call.1} parent=35 // pred_check
          %p644 = pneg %p308
        $region62: #{tpu_custom_call.1} parent=35 // pred_check_branch
          %646 = sbr.rel (%p644) target = $region64
        $region63: #{tpu_custom_call.1} parent=35 // pred_region
          %s647 = sand.u32 %s27, 1
          %s648 = scalar_lea.sflag [#allocation3], %s647
          %s649 = sand.u32 %s298, 1
          %s650 = smul.addr %s649, 256
          %s651 = scalar_lea.vmem [#allocation15], %s650
          %653 = vsyncadd %s648, 0
          %s654 = smul.addr %s27, 32
          %s655 = smul.addr %s654, 8
          %s656 = scalar_lea.hbm %s11, %s655
          %s657 = sshll.u32 %s656, 4
          %s658 = int_to_ptr.hbm [resolvable:$true] %s657
          %s659 = sshll.u32 %s651, 4
          %s660 = int_to_ptr.vmem [resolvable:$true] %s659
          %665 = dma.hbm_to_vmem [thread:$0]  %s658, 4096, %s660, %s648, 256, 256, 16
        $region64: #{tpu_custom_call.1} parent=35 // pred_fallthru
          _
        // Predicated region
        $region65: #{tpu_custom_call.1} parent=35 // pred_check
          %p666 = pneg %p334
        $region66: #{tpu_custom_call.1} parent=35 // pred_check_branch
          %668 = sbr.rel (%p666) target = $region68
        $region67: #{tpu_custom_call.1} parent=35 // pred_region
          %p669 = scmp.lt.s32.totalorder %s27, 1
          %s670 = scalar_select %p669, %s27, 1
          %s671 = smul.addr %s670, 2
          %s672 = scalar_lea.vmem %s12, %s671
        $region68: #{tpu_custom_call.1} parent=35 // pred_fallthru
          _
        // Predicated region
        $region69: #{tpu_custom_call.1} parent=35 // pred_check
          %p673 = pneg %p360
        $region70: #{tpu_custom_call.1} parent=35 // pred_check_branch
          %675 = sbr.rel (%p673) target = $region72
        $region71: #{tpu_custom_call.1} parent=35 // pred_region
          %s676 = sand.u32 %s27, 1
          %s677 = scalar_lea.sflag [#allocation3], %s676
          %s678 = sand.u32 %s350, 1
          %s679 = smul.addr %s678, 256
          %s680 = scalar_lea.vmem [#allocation16], %s679
          %682 = vsyncadd %s677, 0
          %s683 = smul.addr %s27, 32
          %s684 = smul.addr %s683, 8
          %s685 = scalar_lea.hbm %s13, %s684
          %s686 = sshll.u32 %s685, 4
          %s687 = int_to_ptr.hbm [resolvable:$true] %s686
          %s688 = sshll.u32 %s680, 4
          %s689 = int_to_ptr.vmem [resolvable:$true] %s688
          %694 = dma.hbm_to_vmem [thread:$0]  %s687, 4096, %s689, %s677, 128, 128, 8
        $region72: #{tpu_custom_call.1} parent=35 // pred_fallthru
          _
        // Predicated region
        $region73: #{tpu_custom_call.1} parent=35 // pred_check
          %p695 = pneg %p386
        $region74: #{tpu_custom_call.1} parent=35 // pred_check_branch
          %697 = sbr.rel (%p695) target = $region76
        $region75: #{tpu_custom_call.1} parent=35 // pred_region
          %p698 = scmp.lt.s32.totalorder %s27, 1
          %s699 = scalar_select %p698, %s27, 1
          %s700 = scalar_lea.vmem %s14, %s699
        $region76: #{tpu_custom_call.1} parent=35 // pred_fallthru
          _
        // Predicated region
        $region77: #{tpu_custom_call.1} parent=35 // pred_check
          %p701 = pneg %p412
        $region78: #{tpu_custom_call.1} parent=35 // pred_check_branch
          %703 = sbr.rel (%p701) target = $region80
        $region79: #{tpu_custom_call.1} parent=35 // pred_region
          %p704 = scmp.lt.s32.totalorder %s27, 1
          %s705 = scalar_select %p704, %s27, 1
          %s706 = scalar_lea.vmem %s15, %s705
        $region80: #{tpu_custom_call.1} parent=35 // pred_fallthru
          _
        // Predicated region
        $region81: #{tpu_custom_call.1} parent=35 // pred_check
          %p707 = pneg %p438
        $region82: #{tpu_custom_call.1} parent=35 // pred_check_branch
          %709 = sbr.rel (%p707) target = $region84
        $region83: #{tpu_custom_call.1} parent=35 // pred_region
          %p710 = scmp.lt.s32.totalorder %s27, 1
          %s711 = scalar_select %p710, %s27, 1
          %s712 = scalar_lea.vmem %s16, %s711
        $region84: #{tpu_custom_call.1} parent=35 // pred_fallthru
          _
      $region36: #{tpu_custom_call.1} parent=5 // pred_fallthru
        _
      %p713 = scmp.le.s32.totalorder 1, %s27
      %p714 = scmp.lt.s32.totalorder %s27, 3
      %p715 = pnand %p713, %p714
      %p716 = pneg %p715
      // Predicated region
      $region85: #{tpu_custom_call.1} parent=5 // pred_check
        _
      $region86: #{tpu_custom_call.1} parent=5 // pred_check_branch
        %718 = sbr.rel (%p715) target = $region88
      $region87: #{tpu_custom_call.1} parent=5 // pred_region
        %s719 = ssub.s32 %s27, 1
        // Predicated region
        $region89: #{tpu_custom_call.1} parent=87 // pred_check
          %p720 = pneg %p48
        $region90: #{tpu_custom_call.1} parent=87 // pred_check_branch
          %722 = sbr.rel (%p720) target = $region92
        $region91: #{tpu_custom_call.1} parent=87 // pred_region
          %724 = dma.done [#allocation3], 512
        $region92: #{tpu_custom_call.1} parent=87 // pred_fallthru
          _
        // Predicated region
        $region93: #{tpu_custom_call.1} parent=87 // pred_check
          %p725 = pneg %p69
        $region94: #{tpu_custom_call.1} parent=87 // pred_check_branch
          %727 = sbr.rel (%p725) target = $region96
        $region95: #{tpu_custom_call.1} parent=87 // pred_region
          %729 = dma.done [#allocation6], 1280
        $region96: #{tpu_custom_call.1} parent=87 // pred_fallthru
          _
        // Predicated region
        $region97: #{tpu_custom_call.1} parent=87 // pred_check
          %p730 = pneg %p90
        $region98: #{tpu_custom_call.1} parent=87 // pred_check_branch
          %732 = sbr.rel (%p730) target = $region100
        $region99: #{tpu_custom_call.1} parent=87 // pred_region
          %734 = dma.done [#allocation6], 16
        $region100: #{tpu_custom_call.1} parent=87 // pred_fallthru
          _
        // Predicated region
        $region101: #{tpu_custom_call.1} parent=87 // pred_check
          %p735 = pneg %p111
        $region102: #{tpu_custom_call.1} parent=87 // pred_check_branch
          %737 = sbr.rel (%p735) target = $region104
        $region103: #{tpu_custom_call.1} parent=87 // pred_region
          %739 = dma.done [#allocation9], 256
        $region104: #{tpu_custom_call.1} parent=87 // pred_fallthru
          _
        %s740 = sand.u32 %s32, 1
        %s741 = scalar_lea.sflag [#allocation3], %s740
        %s742 = sand.u32 %s145, 1
        %s743 = smul.addr %s742, 384
        %s744 = scalar_lea.vmem [#allocation10], %s743
        // Predicated region
        $region105: #{tpu_custom_call.1} parent=87 // pred_check
          %p745 = pneg %p158
        $region106: #{tpu_custom_call.1} parent=87 // pred_check_branch
          %747 = sbr.rel (%p745) target = $region108
        $region107: #{tpu_custom_call.1} parent=87 // pred_region
          %749 = dma.done %s741, 6144
        $region108: #{tpu_custom_call.1} parent=87 // pred_fallthru
          _
        %s750 = sand.u32 %s32, 1
        %s751 = scalar_lea.sflag [#allocation3], %s750
        %s752 = sand.u32 %s171, 1
        %s753 = smul.addr %s752, 3
        %s754 = scalar_lea.vmem [#allocation11], %s753
        // Predicated region
        $region109: #{tpu_custom_call.1} parent=87 // pred_check
          %p755 = pneg %p184
        $region110: #{tpu_custom_call.1} parent=87 // pred_check_branch
          %757 = sbr.rel (%p755) target = $region112
        $region111: #{tpu_custom_call.1} parent=87 // pred_region
          %759 = dma.done %s751, 48
        $region112: #{tpu_custom_call.1} parent=87 // pred_fallthru
          _
        %s760 = sand.u32 %s32, 1
        %s761 = scalar_lea.sflag [#allocation3], %s760
        %s762 = sand.u32 %s197, 1
        %s763 = smul.addr %s762, 128
        %s764 = scalar_lea.vmem [#allocation12], %s763
        // Predicated region
        $region113: #{tpu_custom_call.1} parent=87 // pred_check
          %p765 = pneg %p210
        $region114: #{tpu_custom_call.1} parent=87 // pred_check_branch
          %767 = sbr.rel (%p765) target = $region116
        $region115: #{tpu_custom_call.1} parent=87 // pred_region
          %769 = dma.done %s761, 2048
        $region116: #{tpu_custom_call.1} parent=87 // pred_fallthru
          _
        %s770 = sand.u32 %s32, 1
        %s771 = scalar_lea.sflag [#allocation3], %s770
        %s772 = sand.u32 %s223, 1
        %s773 = scalar_lea.vmem [#allocation13], %s772
        // Predicated region
        $region117: #{tpu_custom_call.1} parent=87 // pred_check
          %p774 = pneg %p236
        $region118: #{tpu_custom_call.1} parent=87 // pred_check_branch
          %776 = sbr.rel (%p774) target = $region120
        $region119: #{tpu_custom_call.1} parent=87 // pred_region
          %778 = dma.done %s771, 16
        $region120: #{tpu_custom_call.1} parent=87 // pred_fallthru
          _
        %s779 = sand.u32 %s32, 1
        %s780 = scalar_lea.sflag [#allocation3], %s779
        %s781 = sand.u32 %s275, 1
        %s782 = scalar_lea.vmem [#allocation14], %s781
        // Predicated region
        $region121: #{tpu_custom_call.1} parent=87 // pred_check
          %p783 = pneg %p288
        $region122: #{tpu_custom_call.1} parent=87 // pred_check_branch
          %785 = sbr.rel (%p783) target = $region124
        $region123: #{tpu_custom_call.1} parent=87 // pred_region
          %787 = dma.done %s780, 16
        $region124: #{tpu_custom_call.1} parent=87 // pred_fallthru
          _
        %s788 = sand.u32 %s32, 1
        %s789 = scalar_lea.sflag [#allocation3], %s788
        %s790 = sand.u32 %s301, 1
        %s791 = smul.addr %s790, 256
        %s792 = scalar_lea.vmem [#allocation15], %s791
        // Predicated region
        $region125: #{tpu_custom_call.1} parent=87 // pred_check
          %p793 = pneg %p314
        $region126: #{tpu_custom_call.1} parent=87 // pred_check_branch
          %795 = sbr.rel (%p793) target = $region128
        $region127: #{tpu_custom_call.1} parent=87 // pred_region
          %797 = dma.done %s789, 4096
        $region128: #{tpu_custom_call.1} parent=87 // pred_fallthru
          _
        %s798 = sand.u32 %s32, 1
        %s799 = scalar_lea.sflag [#allocation3], %s798
        %s800 = sand.u32 %s353, 1
        %s801 = smul.addr %s800, 256
        %s802 = scalar_lea.vmem [#allocation16], %s801
        // Predicated region
        $region129: #{tpu_custom_call.1} parent=87 // pred_check
          %p803 = pneg %p366
        $region130: #{tpu_custom_call.1} parent=87 // pred_check_branch
          %805 = sbr.rel (%p803) target = $region132
        $region131: #{tpu_custom_call.1} parent=87 // pred_region
          %807 = dma.done %s799, 4096
        $region132: #{tpu_custom_call.1} parent=87 // pred_fallthru
          _
        %p808 = pneg %p48
        %p809 = pneg %p45
        %p810 = pneg %p69
        %p811 = pneg %p66
        %p812 = pneg %p90
        %p813 = pneg %p87
        %p814 = pneg %p111
        %p815 = pneg %p108
        %p816 = pneg %p132
        %p817 = pneg %p129
        %s818 = sand.u32 %s32, 1
        %s819 = scalar_lea.sflag [#allocation3], %s818
        %s820 = sand.u32 %s145, 1
        %s821 = smul.addr %s820, 384
        %s822 = scalar_lea.vmem [#allocation10], %s821
        %p823 = pneg %p158
        %p824 = pneg %p155
        %s825 = sand.u32 %s32, 1
        %s826 = scalar_lea.sflag [#allocation3], %s825
        %s827 = sand.u32 %s171, 1
        %s828 = smul.addr %s827, 3
        %s829 = scalar_lea.vmem [#allocation11], %s828
        %p830 = pneg %p184
        %p831 = pneg %p181
        %s832 = sand.u32 %s32, 1
        %s833 = scalar_lea.sflag [#allocation3], %s832
        %s834 = sand.u32 %s197, 1
        %s835 = smul.addr %s834, 128
        %s836 = scalar_lea.vmem [#allocation12], %s835
        %p837 = pneg %p210
        %p838 = pneg %p207
        %s839 = sand.u32 %s32, 1
        %s840 = scalar_lea.sflag [#allocation3], %s839
        %s841 = sand.u32 %s223, 1
        %s842 = scalar_lea.vmem [#allocation13], %s841
        %p843 = pneg %p236
        %p844 = pneg %p233
        %p845 = scmp.lt.s32.totalorder %s32, 1
        %s846 = scalar_select %p845, %s32, 1
        %s847 = scalar_lea.vmem %s9, %s846
        %p848 = pneg %p262
        %p849 = pneg %p259
        %s850 = sand.u32 %s32, 1
        %s851 = scalar_lea.sflag [#allocation3], %s850
        %s852 = sand.u32 %s275, 1
        %s853 = scalar_lea.vmem [#allocation14], %s852
        %p854 = pneg %p288
        %p855 = pneg %p285
        %s856 = sand.u32 %s32, 1
        %s857 = scalar_lea.sflag [#allocation3], %s856
        %s858 = sand.u32 %s301, 1
        %s859 = smul.addr %s858, 256
        %s860 = scalar_lea.vmem [#allocation15], %s859
        %p861 = pneg %p314
        %p862 = pneg %p311
        %p863 = scmp.lt.s32.totalorder %s32, 1
        %s864 = scalar_select %p863, %s32, 1
        %s865 = smul.addr %s864, 2
        %s866 = scalar_lea.vmem %s12, %s865
        %p867 = pneg %p340
        %p868 = pneg %p337
        %s869 = sand.u32 %s32, 1
        %s870 = scalar_lea.sflag [#allocation3], %s869
        %s871 = sand.u32 %s353, 1
        %s872 = smul.addr %s871, 256
        %s873 = scalar_lea.vmem [#allocation16], %s872
        %p874 = pneg %p366
        %p875 = pneg %p363
        %p876 = scmp.lt.s32.totalorder %s32, 1
        %s877 = scalar_select %p876, %s32, 1
        %s878 = scalar_lea.vmem %s14, %s877
        %p879 = pneg %p392
        %p880 = pneg %p389
        %p881 = scmp.lt.s32.totalorder %s32, 1
        %s882 = scalar_select %p881, %s32, 1
        %s883 = scalar_lea.vmem %s15, %s882
        %p884 = pneg %p418
        %p885 = pneg %p415
        %p886 = scmp.lt.s32.totalorder %s32, 1
        %s887 = scalar_select %p886, %s32, 1
        %s888 = scalar_lea.vmem %s16, %s887
        %p889 = pneg %p444
        %p890 = pneg %p441
        %p891 = pneg %p465
        %p892 = pneg %p462
        %p893 = scmp.lt.s32.totalorder %s32, 1
        %s894 = scalar_select %p893, %s32, 1
        %s895 = scalar_lea.vmem %s9, %s894
        %p896 = scmp.lt.s32.totalorder %s32, 1
        %s897 = scalar_select %p896, %s32, 1
        %s898 = smul.addr %s897, 2
        %s899 = scalar_lea.vmem %s12, %s898
        %p900 = scmp.lt.s32.totalorder %s32, 1
        %s901 = scalar_select %p900, %s32, 1
        %s902 = scalar_lea.vmem %s14, %s901
        %p903 = scmp.lt.s32.totalorder %s32, 1
        %s904 = scalar_select %p903, %s32, 1
        %s905 = scalar_lea.vmem %s15, %s904
        %p906 = scmp.lt.s32.totalorder %s32, 1
        %s907 = scalar_select %p906, %s32, 1
        %s908 = scalar_lea.vmem %s16, %s907
        %p909 = scmp.eq.s32.totalorder %s32, 0
        // Predicated region
        $region133: #{tpu_custom_call.1} parent=87 // pred_check
          %p910 = pneg %p909
        $region134: #{tpu_custom_call.1} parent=87 // pred_check_branch
          %912 = sbr.rel (%p910) target = $region136
        $region135: #{tpu_custom_call.1} parent=87 // pred_region
          %v913 = vld [vmem:[#allocation2] sm:$0xff]
          %v914 = vld [vmem:[#allocation2 + $0x8] sm:$0xff]
          %v915 = vld [vmem:[#allocation2 + $0x10] sm:$0xff]
          %v916 = vld [vmem:[#allocation2 + $0x18] sm:$0xff]
          %v917 = vld [vmem:[#allocation5] sm:$0xff]
          %v918 = vld [vmem:[#allocation5 + $0x8] sm:$0xff]
          %v919 = vld [vmem:[#allocation5 + $0x10] sm:$0xff]
          %v920 = vld [vmem:[#allocation5 + $0x18] sm:$0xff]
          %v921 = vld [vmem:[#allocation5 + $0x20] sm:$0xff]
          %v922 = vld [vmem:[#allocation5 + $0x28] sm:$0xff]
          %v923 = vld [vmem:[#allocation5 + $0x30] sm:$0xff]
          %v924 = vld [vmem:[#allocation5 + $0x38] sm:$0xff]
          %v925 = vld [vmem:[#allocation5 + $0x40] sm:$0xff]
          %v926 = vld [vmem:[#allocation5 + $0x48] sm:$0xff]
          %v927 = vld [vmem:[#allocation7] sm:$0x1]
          %v929 = vperm.slane %v927, 0
          %vm931 = vcmask 654336
          %v933 = vsel %vm931, %v913, 0
          %v936 = vsel %vm931, %v914, 0
          %v939 = vsel %vm931, %v915, 0
          %v942 = vsel %vm931, %v916, 0
          %944 = vmatpush.msra.mxu0 0.0
          %945 = vmatpush.msra.mxu0 0.0
          %946 = vmatpush.msra.mxu0 0.0
          %947 = vmatpush.msra.mxu0 0.0
          %948 = vmatpush.msra.mxu0 0.0
          %949 = vmatpush.msra.mxu0 0.0
          %950 = vmatpush.msra.mxu0 %v926
          %951 = vmatpush.msra.mxu0 %v925
          %952 = vmatpush.msra.mxu0 %v924
          %953 = vmatpush.msra.mxu0 %v923
          %954 = vmatpush.msra.mxu0 %v922
          %955 = vmatpush.msra.mxu0 %v921
          %956 = vmatpush.msra.mxu0 %v920
          %957 = vmatpush.msra.mxu0 %v919
          %958 = vmatpush.msra.mxu0 %v918
          %959 = vmatpush.msra.mxu0 %v917
          %960 = vmatmul.f32.gmra.mxu0 %v933
          %v961 = vpop.f32.mrf.mxu0
          %v962 = vadd.f32 %v929, %v961
          %963 = vmatmul.f32.gmra.mxu0 %v936
          %v964 = vpop.f32.mrf.mxu0
          %v965 = vadd.f32 %v929, %v964
          %966 = vmatmul.f32.gmra.mxu0 %v939
          %v967 = vpop.f32.mrf.mxu0
          %v968 = vadd.f32 %v929, %v967
          %969 = vmatmul.f32.gmra.mxu0 %v942
          %v970 = vpop.f32.mrf.mxu0
          %v971 = vadd.f32 %v929, %v970
          %972 = vdwg.mxu0
          %v973 = vld [vmem:[#allocation8] sm:$0xff]
          %v974 = vld [vmem:[#allocation8 + $0x8] sm:$0xff]
          %v975 = vadd.f32 %v962, %v973
          %v976 = vadd.f32 %v965, %v974
          %v977 = vadd.f32 %v968, %v973
          %v978 = vadd.f32 %v971, %v974
          %979 = vst [vmem:[#allocation17] sm:$0xff] %v975
          %980 = vst [vmem:[#allocation17 + $0x8] sm:$0xff] %v976
          %981 = vst [vmem:[#allocation17 + $0x10] sm:$0xff] %v977
          %982 = vst [vmem:[#allocation17 + $0x18] sm:$0xff] %v978
        $region136: #{tpu_custom_call.1} parent=87 // pred_fallthru
          _
        %v983 = vld [vmem:[#allocation17] sm:$0xff]
        %v984 = vld [vmem:[#allocation17 + $0x8] sm:$0xff]
        %v985 = vld [vmem:[#allocation17 + $0x10] sm:$0xff]
        %v986 = vld [vmem:[#allocation17 + $0x18] sm:$0xff]
        %v987 = vld [vmem:[%s4] sm:$0x1]
        %v988 = vld [vmem:[%s4 + $0x1] sm:$0x1]
        %v989 = vld [vmem:[%s744] sm:$0xff]
        %v990 = vld [vmem:[%s744 + $0x8] sm:$0xff]
        %v991 = vld [vmem:[%s744 + $0x10] sm:$0xff]
        %v992 = vld [vmem:[%s744 + $0x18] sm:$0xff]
        %v993 = vld [vmem:[%s744 + $0x20] sm:$0xff]
        %v994 = vld [vmem:[%s744 + $0x28] sm:$0xff]
        %v995 = vld [vmem:[%s744 + $0x30] sm:$0xff]
        %v996 = vld [vmem:[%s744 + $0x38] sm:$0xff]
        %v997 = vld [vmem:[%s744 + $0x40] sm:$0xff]
        %v998 = vld [vmem:[%s744 + $0x48] sm:$0xff]
        %v999 = vld [vmem:[%s744 + $0x50] sm:$0xff]
        %v1000 = vld [vmem:[%s744 + $0x58] sm:$0xff]
        %v1001 = vld [vmem:[%s744 + $0x60] sm:$0xff]
        %v1002 = vld [vmem:[%s744 + $0x68] sm:$0xff]
        %v1003 = vld [vmem:[%s744 + $0x70] sm:$0xff]
        %v1004 = vld [vmem:[%s744 + $0x78] sm:$0xff]
        %v1005 = vld [vmem:[%s744 + $0x80] sm:$0xff]
        %v1006 = vld [vmem:[%s744 + $0x88] sm:$0xff]
        %v1007 = vld [vmem:[%s744 + $0x90] sm:$0xff]
        %v1008 = vld [vmem:[%s744 + $0x98] sm:$0xff]
        %v1009 = vld [vmem:[%s744 + $0xa0] sm:$0xff]
        %v1010 = vld [vmem:[%s744 + $0xa8] sm:$0xff]
        %v1011 = vld [vmem:[%s744 + $0xb0] sm:$0xff]
        %v1012 = vld [vmem:[%s744 + $0xb8] sm:$0xff]
        %v1013 = vld [vmem:[%s744 + $0xc0] sm:$0xff]
        %v1014 = vld [vmem:[%s744 + $0xc8] sm:$0xff]
        %v1015 = vld [vmem:[%s744 + $0xd0] sm:$0xff]
        %v1016 = vld [vmem:[%s744 + $0xd8] sm:$0xff]
        %v1017 = vld [vmem:[%s744 + $0xe0] sm:$0xff]
        %v1018 = vld [vmem:[%s744 + $0xe8] sm:$0xff]
        %v1019 = vld [vmem:[%s744 + $0xf0] sm:$0xff]
        %v1020 = vld [vmem:[%s744 + $0xf8] sm:$0xff]
        %v1021 = vld [vmem:[%s744 + $0x100] sm:$0xff]
        %v1022 = vld [vmem:[%s744 + $0x108] sm:$0xff]
        %v1023 = vld [vmem:[%s744 + $0x110] sm:$0xff]
        %v1024 = vld [vmem:[%s744 + $0x118] sm:$0xff]
        %v1025 = vld [vmem:[%s744 + $0x120] sm:$0xff]
        %v1026 = vld [vmem:[%s744 + $0x128] sm:$0xff]
        %v1027 = vld [vmem:[%s744 + $0x130] sm:$0xff]
        %v1028 = vld [vmem:[%s744 + $0x138] sm:$0xff]
        %v1029 = vld [vmem:[%s744 + $0x140] sm:$0xff]
        %v1030 = vld [vmem:[%s744 + $0x148] sm:$0xff]
        %v1031 = vld [vmem:[%s744 + $0x150] sm:$0xff]
        %v1032 = vld [vmem:[%s744 + $0x158] sm:$0xff]
        %v1033 = vld [vmem:[%s744 + $0x160] sm:$0xff]
        %v1034 = vld [vmem:[%s744 + $0x168] sm:$0xff]
        %v1035 = vld [vmem:[%s744 + $0x170] sm:$0xff]
        %v1036 = vld [vmem:[%s744 + $0x178] sm:$0xff]
        %v1037 = vld [vmem:[%s754] sm:$0x7]
        %v1039 = vperm.slane %v1037, 0
        %v1040 = vperm.slane %v1037, 1
        %v1041 = vperm.slane %v1037, 2
        %1045 = vmatpush.msra.mxu0 %v1034
        %1046 = vmatpush.msra.mxu0 %v1031
        %1047 = vmatpush.msra.mxu0 %v1028
        %1048 = vmatpush.msra.mxu0 %v1025
        %1049 = vmatpush.msra.mxu0 %v1022
        %1050 = vmatpush.msra.mxu0 %v1019
        %1051 = vmatpush.msra.mxu0 %v1016
        %1052 = vmatpush.msra.mxu0 %v1013
        %1053 = vmatpush.msra.mxu0 %v1010
        %1054 = vmatpush.msra.mxu0 %v1007
        %1055 = vmatpush.msra.mxu0 %v1004
        %1056 = vmatpush.msra.mxu0 %v1001
        %1057 = vmatpush.msra.mxu0 %v998
        %1058 = vmatpush.msra.mxu0 %v995
        %1059 = vmatpush.msra.mxu0 %v992
        %1060 = vmatpush.msra.mxu0 %v989
        %1061 = vmatmul.f32.gmra.mxu0 %v983
        %v1062 = vpop.f32.mrf.mxu0
        %v1063 = vadd.f32 %v1039, %v1062
        %1064 = vmatmul.f32.gmra.mxu0 %v984
        %v1065 = vpop.f32.mrf.mxu0
        %v1066 = vadd.f32 %v1039, %v1065
        %1067 = vmatmul.f32.gmra.mxu0 %v985
        %v1068 = vpop.f32.mrf.mxu0
        %v1069 = vadd.f32 %v1039, %v1068
        %1070 = vmatmul.f32.gmra.mxu0 %v986
        %v1071 = vpop.f32.mrf.mxu0
        %v1072 = vadd.f32 %v1039, %v1071
        %1073 = vdwg.mxu0
        %1074 = vmatpush.msra.mxu0 %v1035
        %1075 = vmatpush.msra.mxu0 %v1032
        %1076 = vmatpush.msra.mxu0 %v1029
        %1077 = vmatpush.msra.mxu0 %v1026
        %1078 = vmatpush.msra.mxu0 %v1023
        %1079 = vmatpush.msra.mxu0 %v1020
        %1080 = vmatpush.msra.mxu0 %v1017
        %1081 = vmatpush.msra.mxu0 %v1014
        %1082 = vmatpush.msra.mxu0 %v1011
        %1083 = vmatpush.msra.mxu0 %v1008
        %1084 = vmatpush.msra.mxu0 %v1005
        %1085 = vmatpush.msra.mxu0 %v1002
        %1086 = vmatpush.msra.mxu0 %v999
        %1087 = vmatpush.msra.mxu0 %v996
        %1088 = vmatpush.msra.mxu0 %v993
        %1089 = vmatpush.msra.mxu0 %v990
        %1090 = vmatmul.f32.gmra.mxu0 %v983
        %v1091 = vpop.f32.mrf.mxu0
        %v1092 = vadd.f32 %v1040, %v1091
        %1093 = vmatmul.f32.gmra.mxu0 %v984
        %v1094 = vpop.f32.mrf.mxu0
        %v1095 = vadd.f32 %v1040, %v1094
        %1096 = vmatmul.f32.gmra.mxu0 %v985
        %v1097 = vpop.f32.mrf.mxu0
        %v1098 = vadd.f32 %v1040, %v1097
        %1099 = vmatmul.f32.gmra.mxu0 %v986
        %v1100 = vpop.f32.mrf.mxu0
        %v1101 = vadd.f32 %v1040, %v1100
        %1102 = vdwg.mxu0
        %1103 = vmatpush.msra.mxu0 %v1036
        %1104 = vmatpush.msra.mxu0 %v1033
        %1105 = vmatpush.msra.mxu0 %v1030
        %1106 = vmatpush.msra.mxu0 %v1027
        %1107 = vmatpush.msra.mxu0 %v1024
        %1108 = vmatpush.msra.mxu0 %v1021
        %1109 = vmatpush.msra.mxu0 %v1018
        %1110 = vmatpush.msra.mxu0 %v1015
        %1111 = vmatpush.msra.mxu0 %v1012
        %1112 = vmatpush.msra.mxu0 %v1009
        %1113 = vmatpush.msra.mxu0 %v1006
        %1114 = vmatpush.msra.mxu0 %v1003
        %1115 = vmatpush.msra.mxu0 %v1000
        %1116 = vmatpush.msra.mxu0 %v997
        %1117 = vmatpush.msra.mxu0 %v994
        %1118 = vmatpush.msra.mxu0 %v991
        %1119 = vmatmul.f32.gmra.mxu0 %v983
        %v1120 = vpop.f32.mrf.mxu0
        %v1121 = vadd.f32 %v1041, %v1120
        %1122 = vmatmul.f32.gmra.mxu0 %v984
        %v1123 = vpop.f32.mrf.mxu0
        %v1124 = vadd.f32 %v1041, %v1123
        %1125 = vmatmul.f32.gmra.mxu0 %v985
        %v1126 = vpop.f32.mrf.mxu0
        %v1127 = vadd.f32 %v1041, %v1126
        %1128 = vmatmul.f32.gmra.mxu0 %v986
        %v1129 = vpop.f32.mrf.mxu0
        %v1130 = vadd.f32 %v1041, %v1129
        %1131 = vdwg.mxu0
        %vm1132 = vcmask 261120
        %v1134 = vsel %vm1132, %v1063, 0
        %v1137 = vsel %vm1132, %v1066, 0
        %v1140 = vsel %vm1132, %v1092, 0
        %v1143 = vsel %vm1132, %v1095, 0
        %1145 = vmatpush.xpose.msra.mxu0 0.0
        %1146 = vmatpush.xpose.msra.mxu0 0.0
        %1147 = vmatpush.xpose.msra.mxu0 0.0
        %1148 = vmatpush.xpose.msra.mxu0 0.0
        %1149 = vmatpush.xpose.msra.mxu0 0.0
        %1150 = vmatpush.xpose.msra.mxu0 0.0
        %1151 = vmatpush.xpose.msra.mxu0 0.0
        %1152 = vmatpush.xpose.msra.mxu0 0.0
        %1153 = vmatpush.xpose.msra.mxu0 0.0
        %1154 = vmatpush.xpose.msra.mxu0 0.0
        %1155 = vmatpush.xpose.msra.mxu0 0.0
        %1156 = vmatpush.xpose.msra.mxu0 0.0
        %1157 = vmatpush.xpose.msra.mxu0 0.0
        %1158 = vmatpush.xpose.msra.mxu0 0.0
        %1159 = vmatpush.xpose.msra.mxu0 %v1143
        %1160 = vmatpush.xpose.msra.mxu0 %v1140
        %1161 = vmatmul.f32.gmra.mxu0 %v1134
        %v1162 = vpop.f32.mrf.mxu0
        %v1163 = vadd.f32 0.0, %v1162
        %1164 = vmatmul.f32.gmra.mxu0 %v1137
        %v1165 = vpop.f32.mrf.mxu0
        %v1166 = vadd.f32 0.0, %v1165
        %1167 = vdwg.mxu0
        %v1169 = vsel %vm1132, %v1069, 0
        %v1172 = vsel %vm1132, %v1072, 0
        %v1175 = vsel %vm1132, %v1098, 0
        %v1178 = vsel %vm1132, %v1101, 0
        %1180 = vmatpush.xpose.msra.mxu0 0.0
        %1181 = vmatpush.xpose.msra.mxu0 0.0
        %1182 = vmatpush.xpose.msra.mxu0 0.0
        %1183 = vmatpush.xpose.msra.mxu0 0.0
        %1184 = vmatpush.xpose.msra.mxu0 0.0
        %1185 = vmatpush.xpose.msra.mxu0 0.0
        %1186 = vmatpush.xpose.msra.mxu0 0.0
        %1187 = vmatpush.xpose.msra.mxu0 0.0
        %1188 = vmatpush.xpose.msra.mxu0 0.0
        %1189 = vmatpush.xpose.msra.mxu0 0.0
        %1190 = vmatpush.xpose.msra.mxu0 0.0
        %1191 = vmatpush.xpose.msra.mxu0 0.0
        %1192 = vmatpush.xpose.msra.mxu0 0.0
        %1193 = vmatpush.xpose.msra.mxu0 0.0
        %1194 = vmatpush.xpose.msra.mxu0 %v1178
        %1195 = vmatpush.xpose.msra.mxu0 %v1175
        %1196 = vmatmul.f32.gmra.mxu0 %v1169
        %v1197 = vpop.f32.mrf.mxu0
        %v1198 = vadd.f32 0.0, %v1197
        %1199 = vmatmul.f32.gmra.mxu0 %v1172
        %v1200 = vpop.f32.mrf.mxu0
        %v1201 = vadd.f32 0.0, %v1200
        %1202 = vdwg.mxu0
        %v1203 = vmul.f32 %v1163, 0.17677669
        %v1204 = vmul.f32 %v1166, 0.17677669
        %v1205 = vmul.f32 %v1198, 0.17677669
        %v1206 = vmul.f32 %v1201, 0.17677669
        %vm1207 = vcmp.gt.f32.partialorder %v987, 0.0
        %vm1208 = vcmp.gt.f32.partialorder %v988, 0.0
        %v1209 = vsel %vm1207, 1, 0
        %v1210 = vsel %vm1208, 1, 0
        %v1211 = vperm.slane %v1209, 0
        %v1212 = vperm.slane %v1210, 0
        %vm1213 = vcmp.eq.s32.totalorder %v1211, 1
        %vm1214 = vcmp.eq.s32.totalorder %v1212, 1
        %v1215 = vsel %vm1213, %v1203, -1e+30
        %v1216 = vsel %vm1213, %v1204, -1e+30
        %v1217 = vsel %vm1214, %v1205, -1e+30
        %v1218 = vsel %vm1214, %v1206, -1e+30
        %vm1219 = vcmask 130048
        %v1220 = vsel %vm1219, %v1215, -inf
        %1221 = vmax.xlane.f32.xlu0 %v1220
        %v1222 = vpop.xlane.xlu0 %1221
        %v1223 = vsel %vm1219, %v1216, -inf
        %1224 = vmax.xlane.f32.xlu0 %v1223
        %v1225 = vpop.xlane.xlu0 %1224
        %v1226 = vsel %vm1219, %v1217, -inf
        %1227 = vmax.xlane.f32.xlu0 %v1226
        %v1228 = vpop.xlane.xlu0 %1227
        %v1229 = vsel %vm1219, %v1218, -inf
        %1230 = vmax.xlane.f32.xlu0 %v1229
        %v1231 = vpop.xlane.xlu0 %1230
        %v1232 = vsub.f32 %v1215, %v1222
        %v1233 = vsub.f32 %v1216, %v1225
        %v1234 = vsub.f32 %v1217, %v1228
        %v1235 = vsub.f32 %v1218, %v1231
        %v1236 = vmul.f32 %v1232, 1.442695
        %v1237 = vpow.pop %v1236
        %v1238 = vmul.f32 %v1233, 1.442695
        %v1239 = vpow.pop %v1238
        %v1240 = vmul.f32 %v1234, 1.442695
        %v1241 = vpow.pop %v1240
        %v1242 = vmul.f32 %v1235, 1.442695
        %v1243 = vpow.pop %v1242
        %v1244 = vsel %vm1219, %v1237, 0.0
        %1245 = vadd.xlane.f32.xlu0 %v1244
        %v1246 = vpop.xlane.xlu0 %1245
        %v1247 = vsel %vm1219, %v1239, 0.0
        %1248 = vadd.xlane.f32.xlu0 %v1247
        %v1249 = vpop.xlane.xlu0 %1248
        %v1250 = vsel %vm1219, %v1241, 0.0
        %1251 = vadd.xlane.f32.xlu0 %v1250
        %v1252 = vpop.xlane.xlu0 %1251
        %v1253 = vsel %vm1219, %v1243, 0.0
        %1254 = vadd.xlane.f32.xlu0 %v1253
        %v1255 = vpop.xlane.xlu0 %1254
        %v1256 = vrcp.pop %v1246
        %v1257 = vrcp.pop %v1249
        %v1258 = vrcp.pop %v1252
        %v1259 = vrcp.pop %v1255
        %v1260 = vmul.f32 %v1237, %v1256
        %v1261 = vmul.f32 %v1239, %v1257
        %v1262 = vmul.f32 %v1241, %v1258
        %v1263 = vmul.f32 %v1243, %v1259
        %v1265 = vsel %vm1219, %v1260, 0
        %v1268 = vsel %vm1219, %v1261, 0
        %1270 = vmatpush.msra.mxu0 0.0
        %1271 = vmatpush.msra.mxu0 0.0
        %1272 = vmatpush.msra.mxu0 0.0
        %1273 = vmatpush.msra.mxu0 0.0
        %1274 = vmatpush.msra.mxu0 0.0
        %1275 = vmatpush.msra.mxu0 0.0
        %1276 = vmatpush.msra.mxu0 0.0
        %1277 = vmatpush.msra.mxu0 0.0
        %1278 = vmatpush.msra.mxu0 0.0
        %1279 = vmatpush.msra.mxu0 0.0
        %1280 = vmatpush.msra.mxu0 0.0
        %1281 = vmatpush.msra.mxu0 0.0
        %1282 = vmatpush.msra.mxu0 0.0
        %1283 = vmatpush.msra.mxu0 0.0
        %1284 = vmatpush.msra.mxu0 %v1124
        %1285 = vmatpush.msra.mxu0 %v1121
        %1286 = vmatmul.f32.gmra.mxu0 %v1265
        %v1287 = vpop.f32.mrf.mxu0
        %v1288 = vadd.f32 0.0, %v1287
        %1289 = vmatmul.f32.gmra.mxu0 %v1268
        %v1290 = vpop.f32.mrf.mxu0
        %v1291 = vadd.f32 0.0, %v1290
        %1292 = vdwg.mxu0
        %v1294 = vsel %vm1219, %v1262, 0
        %v1297 = vsel %vm1219, %v1263, 0
        %1299 = vmatpush.msra.mxu0 0.0
        %1300 = vmatpush.msra.mxu0 0.0
        %1301 = vmatpush.msra.mxu0 0.0
        %1302 = vmatpush.msra.mxu0 0.0
        %1303 = vmatpush.msra.mxu0 0.0
        %1304 = vmatpush.msra.mxu0 0.0
        %1305 = vmatpush.msra.mxu0 0.0
        %1306 = vmatpush.msra.mxu0 0.0
        %1307 = vmatpush.msra.mxu0 0.0
        %1308 = vmatpush.msra.mxu0 0.0
        %1309 = vmatpush.msra.mxu0 0.0
        %1310 = vmatpush.msra.mxu0 0.0
        %1311 = vmatpush.msra.mxu0 0.0
        %1312 = vmatpush.msra.mxu0 0.0
        %1313 = vmatpush.msra.mxu0 %v1130
        %1314 = vmatpush.msra.mxu0 %v1127
        %1315 = vmatmul.f32.gmra.mxu0 %v1294
        %v1316 = vpop.f32.mrf.mxu0
        %v1317 = vadd.f32 0.0, %v1316
        %1318 = vmatmul.f32.gmra.mxu0 %v1297
        %v1319 = vpop.f32.mrf.mxu0
        %v1320 = vadd.f32 0.0, %v1319
        %1321 = vdwg.mxu0
        %1322 = vrot.lane.b32.xlu0 %v1063, 96
        %v1323 = vpop.permute.xlu0 %1322
        %1324 = vrot.lane.b32.xlu0 %v1066, 96
        %v1325 = vpop.permute.xlu0 %1324
        %1326 = vrot.lane.b32.xlu0 %v1092, 96
        %v1327 = vpop.permute.xlu0 %1326
        %1328 = vrot.lane.b32.xlu0 %v1095, 96
        %v1329 = vpop.permute.xlu0 %1328
        %v1330 = vsel %vm1132, %v1323, 0
        %v1332 = vsel %vm1132, %v1325, 0
        %v1334 = vsel %vm1132, %v1327, 0
        %v1336 = vsel %vm1132, %v1329, 0
        %1338 = vmatpush.xpose.msra.mxu0 0.0
        %1339 = vmatpush.xpose.msra.mxu0 0.0
        %1340 = vmatpush.xpose.msra.mxu0 0.0
        %1341 = vmatpush.xpose.msra.mxu0 0.0
        %1342 = vmatpush.xpose.msra.mxu0 0.0
        %1343 = vmatpush.xpose.msra.mxu0 0.0
        %1344 = vmatpush.xpose.msra.mxu0 0.0
        %1345 = vmatpush.xpose.msra.mxu0 0.0
        %1346 = vmatpush.xpose.msra.mxu0 0.0
        %1347 = vmatpush.xpose.msra.mxu0 0.0
        %1348 = vmatpush.xpose.msra.mxu0 0.0
        %1349 = vmatpush.xpose.msra.mxu0 0.0
        %1350 = vmatpush.xpose.msra.mxu0 0.0
        %1351 = vmatpush.xpose.msra.mxu0 0.0
        %1352 = vmatpush.xpose.msra.mxu0 %v1336
        %1353 = vmatpush.xpose.msra.mxu0 %v1334
        %1354 = vmatmul.f32.gmra.mxu0 %v1330
        %v1355 = vpop.f32.mrf.mxu0
        %v1356 = vadd.f32 0.0, %v1355
        %1357 = vmatmul.f32.gmra.mxu0 %v1332
        %v1358 = vpop.f32.mrf.mxu0
        %v1359 = vadd.f32 0.0, %v1358
        %1360 = vdwg.mxu0
        %1361 = vrot.lane.b32.xlu0 %v1069, 96
        %v1362 = vpop.permute.xlu0 %1361
        %1363 = vrot.lane.b32.xlu0 %v1072, 96
        %v1364 = vpop.permute.xlu0 %1363
        %1365 = vrot.lane.b32.xlu0 %v1098, 96
        %v1366 = vpop.permute.xlu0 %1365
        %1367 = vrot.lane.b32.xlu0 %v1101, 96
        %v1368 = vpop.permute.xlu0 %1367
        %v1369 = vsel %vm1132, %v1362, 0
        %v1371 = vsel %vm1132, %v1364, 0
        %v1373 = vsel %vm1132, %v1366, 0
        %v1375 = vsel %vm1132, %v1368, 0
        %1377 = vmatpush.xpose.msra.mxu0 0.0
        %1378 = vmatpush.xpose.msra.mxu0 0.0
        %1379 = vmatpush.xpose.msra.mxu0 0.0
        %1380 = vmatpush.xpose.msra.mxu0 0.0
        %1381 = vmatpush.xpose.msra.mxu0 0.0
        %1382 = vmatpush.xpose.msra.mxu0 0.0
        %1383 = vmatpush.xpose.msra.mxu0 0.0
        %1384 = vmatpush.xpose.msra.mxu0 0.0
        %1385 = vmatpush.xpose.msra.mxu0 0.0
        %1386 = vmatpush.xpose.msra.mxu0 0.0
        %1387 = vmatpush.xpose.msra.mxu0 0.0
        %1388 = vmatpush.xpose.msra.mxu0 0.0
        %1389 = vmatpush.xpose.msra.mxu0 0.0
        %1390 = vmatpush.xpose.msra.mxu0 0.0
        %1391 = vmatpush.xpose.msra.mxu0 %v1375
        %1392 = vmatpush.xpose.msra.mxu0 %v1373
        %1393 = vmatmul.f32.gmra.mxu0 %v1369
        %v1394 = vpop.f32.mrf.mxu0
        %v1395 = vadd.f32 0.0, %v1394
        %1396 = vmatmul.f32.gmra.mxu0 %v1371
        %v1397 = vpop.f32.mrf.mxu0
        %v1398 = vadd.f32 0.0, %v1397
        %1399 = vdwg.mxu0
        %v1400 = vmul.f32 %v1356, 0.17677669
        %v1401 = vmul.f32 %v1359, 0.17677669
        %v1402 = vmul.f32 %v1395, 0.17677669
        %v1403 = vmul.f32 %v1398, 0.17677669
        %v1404 = vsel %vm1213, %v1400, -1e+30
        %v1405 = vsel %vm1213, %v1401, -1e+30
        %v1406 = vsel %vm1214, %v1402, -1e+30
        %v1407 = vsel %vm1214, %v1403, -1e+30
        %v1408 = vsel %vm1219, %v1404, -inf
        %1409 = vmax.xlane.f32.xlu0 %v1408
        %v1410 = vpop.xlane.xlu0 %1409
        %v1411 = vsel %vm1219, %v1405, -inf
        %1412 = vmax.xlane.f32.xlu0 %v1411
        %v1413 = vpop.xlane.xlu0 %1412
        %v1414 = vsel %vm1219, %v1406, -inf
        %1415 = vmax.xlane.f32.xlu0 %v1414
        %v1416 = vpop.xlane.xlu0 %1415
        %v1417 = vsel %vm1219, %v1407, -inf
        %1418 = vmax.xlane.f32.xlu0 %v1417
        %v1419 = vpop.xlane.xlu0 %1418
        %v1420 = vsub.f32 %v1404, %v1410
        %v1421 = vsub.f32 %v1405, %v1413
        %v1422 = vsub.f32 %v1406, %v1416
        %v1423 = vsub.f32 %v1407, %v1419
        %v1424 = vmul.f32 %v1420, 1.442695
        %v1425 = vpow.pop %v1424
        %v1426 = vmul.f32 %v1421, 1.442695
        %v1427 = vpow.pop %v1426
        %v1428 = vmul.f32 %v1422, 1.442695
        %v1429 = vpow.pop %v1428
        %v1430 = vmul.f32 %v1423, 1.442695
        %v1431 = vpow.pop %v1430
        %v1432 = vsel %vm1219, %v1425, 0.0
        %1433 = vadd.xlane.f32.xlu0 %v1432
        %v1434 = vpop.xlane.xlu0 %1433
        %v1435 = vsel %vm1219, %v1427, 0.0
        %1436 = vadd.xlane.f32.xlu0 %v1435
        %v1437 = vpop.xlane.xlu0 %1436
        %v1438 = vsel %vm1219, %v1429, 0.0
        %1439 = vadd.xlane.f32.xlu0 %v1438
        %v1440 = vpop.xlane.xlu0 %1439
        %v1441 = vsel %vm1219, %v1431, 0.0
        %1442 = vadd.xlane.f32.xlu0 %v1441
        %v1443 = vpop.xlane.xlu0 %1442
        %v1444 = vrcp.pop %v1434
        %v1445 = vrcp.pop %v1437
        %v1446 = vrcp.pop %v1440
        %v1447 = vrcp.pop %v1443
        %v1448 = vmul.f32 %v1425, %v1444
        %v1449 = vmul.f32 %v1427, %v1445
        %v1450 = vmul.f32 %v1429, %v1446
        %v1451 = vmul.f32 %v1431, %v1447
        %1454 = vrot.lane.b32.xlu0 %v1121, 96
        %v1455 = vpop.permute.xlu0 %1454
        %1456 = vrot.lane.b32.xlu0 %v1124, 96
        %v1457 = vpop.permute.xlu0 %1456
        %v1461 = vsel %vm1219, %v1448, 0
        %v1464 = vsel %vm1219, %v1449, 0
        %1466 = vmatpush.msra.mxu0 0.0
        %1467 = vmatpush.msra.mxu0 0.0
        %1468 = vmatpush.msra.mxu0 0.0
        %1469 = vmatpush.msra.mxu0 0.0
        %1470 = vmatpush.msra.mxu0 0.0
        %1471 = vmatpush.msra.mxu0 0.0
        %1472 = vmatpush.msra.mxu0 0.0
        %1473 = vmatpush.msra.mxu0 0.0
        %1474 = vmatpush.msra.mxu0 0.0
        %1475 = vmatpush.msra.mxu0 0.0
        %1476 = vmatpush.msra.mxu0 0.0
        %1477 = vmatpush.msra.mxu0 0.0
        %1478 = vmatpush.msra.mxu0 0.0
        %1479 = vmatpush.msra.mxu0 0.0
        %1480 = vmatpush.msra.mxu0 %v1457
        %1481 = vmatpush.msra.mxu0 %v1455
        %1482 = vmatmul.f32.gmra.mxu0 %v1461
        %v1483 = vpop.f32.mrf.mxu0
        %v1484 = vadd.f32 0.0, %v1483
        %1485 = vmatmul.f32.gmra.mxu0 %v1464
        %v1486 = vpop.f32.mrf.mxu0
        %v1487 = vadd.f32 0.0, %v1486
        %1488 = vdwg.mxu0
        %1491 = vrot.lane.b32.xlu0 %v1127, 96
        %v1492 = vpop.permute.xlu0 %1491
        %1493 = vrot.lane.b32.xlu0 %v1130, 96
        %v1494 = vpop.permute.xlu0 %1493
        %v1498 = vsel %vm1219, %v1450, 0
        %v1501 = vsel %vm1219, %v1451, 0
        %1503 = vmatpush.msra.mxu0 0.0
        %1504 = vmatpush.msra.mxu0 0.0
        %1505 = vmatpush.msra.mxu0 0.0
        %1506 = vmatpush.msra.mxu0 0.0
        %1507 = vmatpush.msra.mxu0 0.0
        %1508 = vmatpush.msra.mxu0 0.0
        %1509 = vmatpush.msra.mxu0 0.0
        %1510 = vmatpush.msra.mxu0 0.0
        %1511 = vmatpush.msra.mxu0 0.0
        %1512 = vmatpush.msra.mxu0 0.0
        %1513 = vmatpush.msra.mxu0 0.0
        %1514 = vmatpush.msra.mxu0 0.0
        %1515 = vmatpush.msra.mxu0 0.0
        %1516 = vmatpush.msra.mxu0 0.0
        %1517 = vmatpush.msra.mxu0 %v1494
        %1518 = vmatpush.msra.mxu0 %v1492
        %1519 = vmatmul.f32.gmra.mxu0 %v1498
        %v1520 = vpop.f32.mrf.mxu0
        %v1521 = vadd.f32 0.0, %v1520
        %1522 = vmatmul.f32.gmra.mxu0 %v1501
        %v1523 = vpop.f32.mrf.mxu0
        %v1524 = vadd.f32 0.0, %v1523
        %1525 = vdwg.mxu0
        %1526 = vrot.lane.b32.xlu0 %v1063, 64
        %v1527 = vpop.permute.xlu0 %1526
        %1528 = vrot.lane.b32.xlu0 %v1066, 64
        %v1529 = vpop.permute.xlu0 %1528
        %1530 = vrot.lane.b32.xlu0 %v1092, 64
        %v1531 = vpop.permute.xlu0 %1530
        %1532 = vrot.lane.b32.xlu0 %v1095, 64
        %v1533 = vpop.permute.xlu0 %1532
        %v1534 = vsel %vm1132, %v1527, 0
        %v1536 = vsel %vm1132, %v1529, 0
        %v1538 = vsel %vm1132, %v1531, 0
        %v1540 = vsel %vm1132, %v1533, 0
        %1542 = vmatpush.xpose.msra.mxu0 0.0
        %1543 = vmatpush.xpose.msra.mxu0 0.0
        %1544 = vmatpush.xpose.msra.mxu0 0.0
        %1545 = vmatpush.xpose.msra.mxu0 0.0
        %1546 = vmatpush.xpose.msra.mxu0 0.0
        %1547 = vmatpush.xpose.msra.mxu0 0.0
        %1548 = vmatpush.xpose.msra.mxu0 0.0
        %1549 = vmatpush.xpose.msra.mxu0 0.0
        %1550 = vmatpush.xpose.msra.mxu0 0.0
        %1551 = vmatpush.xpose.msra.mxu0 0.0
        %1552 = vmatpush.xpose.msra.mxu0 0.0
        %1553 = vmatpush.xpose.msra.mxu0 0.0
        %1554 = vmatpush.xpose.msra.mxu0 0.0
        %1555 = vmatpush.xpose.msra.mxu0 0.0
        %1556 = vmatpush.xpose.msra.mxu0 %v1540
        %1557 = vmatpush.xpose.msra.mxu0 %v1538
        %1558 = vmatmul.f32.gmra.mxu0 %v1534
        %v1559 = vpop.f32.mrf.mxu0
        %v1560 = vadd.f32 0.0, %v1559
        %1561 = vmatmul.f32.gmra.mxu0 %v1536
        %v1562 = vpop.f32.mrf.mxu0
        %v1563 = vadd.f32 0.0, %v1562
        %1564 = vdwg.mxu0
        %1565 = vrot.lane.b32.xlu0 %v1069, 64
        %v1566 = vpop.permute.xlu0 %1565
        %1567 = vrot.lane.b32.xlu0 %v1072, 64
        %v1568 = vpop.permute.xlu0 %1567
        %1569 = vrot.lane.b32.xlu0 %v1098, 64
        %v1570 = vpop.permute.xlu0 %1569
        %1571 = vrot.lane.b32.xlu0 %v1101, 64
        %v1572 = vpop.permute.xlu0 %1571
        %v1573 = vsel %vm1132, %v1566, 0
        %v1575 = vsel %vm1132, %v1568, 0
        %v1577 = vsel %vm1132, %v1570, 0
        %v1579 = vsel %vm1132, %v1572, 0
        %1581 = vmatpush.xpose.msra.mxu0 0.0
        %1582 = vmatpush.xpose.msra.mxu0 0.0
        %1583 = vmatpush.xpose.msra.mxu0 0.0
        %1584 = vmatpush.xpose.msra.mxu0 0.0
        %1585 = vmatpush.xpose.msra.mxu0 0.0
        %1586 = vmatpush.xpose.msra.mxu0 0.0
        %1587 = vmatpush.xpose.msra.mxu0 0.0
        %1588 = vmatpush.xpose.msra.mxu0 0.0
        %1589 = vmatpush.xpose.msra.mxu0 0.0
        %1590 = vmatpush.xpose.msra.mxu0 0.0
        %1591 = vmatpush.xpose.msra.mxu0 0.0
        %1592 = vmatpush.xpose.msra.mxu0 0.0
        %1593 = vmatpush.xpose.msra.mxu0 0.0
        %1594 = vmatpush.xpose.msra.mxu0 0.0
        %1595 = vmatpush.xpose.msra.mxu0 %v1579
        %1596 = vmatpush.xpose.msra.mxu0 %v1577
        %1597 = vmatmul.f32.gmra.mxu0 %v1573
        %v1598 = vpop.f32.mrf.mxu0
        %v1599 = vadd.f32 0.0, %v1598
        %1600 = vmatmul.f32.gmra.mxu0 %v1575
        %v1601 = vpop.f32.mrf.mxu0
        %v1602 = vadd.f32 0.0, %v1601
        %1603 = vdwg.mxu0
        %v1604 = vmul.f32 %v1560, 0.17677669
        %v1605 = vmul.f32 %v1563, 0.17677669
        %v1606 = vmul.f32 %v1599, 0.17677669
        %v1607 = vmul.f32 %v1602, 0.17677669
        %v1608 = vsel %vm1213, %v1604, -1e+30
        %v1609 = vsel %vm1213, %v1605, -1e+30
        %v1610 = vsel %vm1214, %v1606, -1e+30
        %v1611 = vsel %vm1214, %v1607, -1e+30
        %v1612 = vsel %vm1219, %v1608, -inf
        %1613 = vmax.xlane.f32.xlu0 %v1612
        %v1614 = vpop.xlane.xlu0 %1613
        %v1615 = vsel %vm1219, %v1609, -inf
        %1616 = vmax.xlane.f32.xlu0 %v1615
        %v1617 = vpop.xlane.xlu0 %1616
        %v1618 = vsel %vm1219, %v1610, -inf
        %1619 = vmax.xlane.f32.xlu0 %v1618
        %v1620 = vpop.xlane.xlu0 %1619
        %v1621 = vsel %vm1219, %v1611, -inf
        %1622 = vmax.xlane.f32.xlu0 %v1621
        %v1623 = vpop.xlane.xlu0 %1622
        %v1624 = vsub.f32 %v1608, %v1614
        %v1625 = vsub.f32 %v1609, %v1617
        %v1626 = vsub.f32 %v1610, %v1620
        %v1627 = vsub.f32 %v1611, %v1623
        %v1628 = vmul.f32 %v1624, 1.442695
        %v1629 = vpow.pop %v1628
        %v1630 = vmul.f32 %v1625, 1.442695
        %v1631 = vpow.pop %v1630
        %v1632 = vmul.f32 %v1626, 1.442695
        %v1633 = vpow.pop %v1632
        %v1634 = vmul.f32 %v1627, 1.442695
        %v1635 = vpow.pop %v1634
        %v1636 = vsel %vm1219, %v1629, 0.0
        %1637 = vadd.xlane.f32.xlu0 %v1636
        %v1638 = vpop.xlane.xlu0 %1637
        %v1639 = vsel %vm1219, %v1631, 0.0
        %1640 = vadd.xlane.f32.xlu0 %v1639
        %v1641 = vpop.xlane.xlu0 %1640
        %v1642 = vsel %vm1219, %v1633, 0.0
        %1643 = vadd.xlane.f32.xlu0 %v1642
        %v1644 = vpop.xlane.xlu0 %1643
        %v1645 = vsel %vm1219, %v1635, 0.0
        %1646 = vadd.xlane.f32.xlu0 %v1645
        %v1647 = vpop.xlane.xlu0 %1646
        %v1648 = vrcp.pop %v1638
        %v1649 = vrcp.pop %v1641
        %v1650 = vrcp.pop %v1644
        %v1651 = vrcp.pop %v1647
        %v1652 = vmul.f32 %v1629, %v1648
        %v1653 = vmul.f32 %v1631, %v1649
        %v1654 = vmul.f32 %v1633, %v1650
        %v1655 = vmul.f32 %v1635, %v1651
        %1656 = vrot.lane.b32.xlu0 %v1121, 64
        %v1657 = vpop.permute.xlu0 %1656
        %1658 = vrot.lane.b32.xlu0 %v1124, 64
        %v1659 = vpop.permute.xlu0 %1658
        %v1663 = vsel %vm1219, %v1652, 0
        %v1666 = vsel %vm1219, %v1653, 0
        %1668 = vmatpush.msra.mxu0 0.0
        %1669 = vmatpush.msra.mxu0 0.0
        %1670 = vmatpush.msra.mxu0 0.0
        %1671 = vmatpush.msra.mxu0 0.0
        %1672 = vmatpush.msra.mxu0 0.0
        %1673 = vmatpush.msra.mxu0 0.0
        %1674 = vmatpush.msra.mxu0 0.0
        %1675 = vmatpush.msra.mxu0 0.0
        %1676 = vmatpush.msra.mxu0 0.0
        %1677 = vmatpush.msra.mxu0 0.0
        %1678 = vmatpush.msra.mxu0 0.0
        %1679 = vmatpush.msra.mxu0 0.0
        %1680 = vmatpush.msra.mxu0 0.0
        %1681 = vmatpush.msra.mxu0 0.0
        %1682 = vmatpush.msra.mxu0 %v1659
        %1683 = vmatpush.msra.mxu0 %v1657
        %1684 = vmatmul.f32.gmra.mxu0 %v1663
        %v1685 = vpop.f32.mrf.mxu0
        %v1686 = vadd.f32 0.0, %v1685
        %1687 = vmatmul.f32.gmra.mxu0 %v1666
        %v1688 = vpop.f32.mrf.mxu0
        %v1689 = vadd.f32 0.0, %v1688
        %1690 = vdwg.mxu0
        %1691 = vrot.lane.b32.xlu0 %v1127, 64
        %v1692 = vpop.permute.xlu0 %1691
        %1693 = vrot.lane.b32.xlu0 %v1130, 64
        %v1694 = vpop.permute.xlu0 %1693
        %v1698 = vsel %vm1219, %v1654, 0
        %v1701 = vsel %vm1219, %v1655, 0
        %1703 = vmatpush.msra.mxu0 0.0
        %1704 = vmatpush.msra.mxu0 0.0
        %1705 = vmatpush.msra.mxu0 0.0
        %1706 = vmatpush.msra.mxu0 0.0
        %1707 = vmatpush.msra.mxu0 0.0
        %1708 = vmatpush.msra.mxu0 0.0
        %1709 = vmatpush.msra.mxu0 0.0
        %1710 = vmatpush.msra.mxu0 0.0
        %1711 = vmatpush.msra.mxu0 0.0
        %1712 = vmatpush.msra.mxu0 0.0
        %1713 = vmatpush.msra.mxu0 0.0
        %1714 = vmatpush.msra.mxu0 0.0
        %1715 = vmatpush.msra.mxu0 0.0
        %1716 = vmatpush.msra.mxu0 0.0
        %1717 = vmatpush.msra.mxu0 %v1694
        %1718 = vmatpush.msra.mxu0 %v1692
        %1719 = vmatmul.f32.gmra.mxu0 %v1698
        %v1720 = vpop.f32.mrf.mxu0
        %v1721 = vadd.f32 0.0, %v1720
        %1722 = vmatmul.f32.gmra.mxu0 %v1701
        %v1723 = vpop.f32.mrf.mxu0
        %v1724 = vadd.f32 0.0, %v1723
        %1725 = vdwg.mxu0
        %1726 = vrot.lane.b32.xlu0 %v1063, 32
        %v1727 = vpop.permute.xlu0 %1726
        %1728 = vrot.lane.b32.xlu0 %v1066, 32
        %v1729 = vpop.permute.xlu0 %1728
        %1730 = vrot.lane.b32.xlu0 %v1092, 32
        %v1731 = vpop.permute.xlu0 %1730
        %1732 = vrot.lane.b32.xlu0 %v1095, 32
        %v1733 = vpop.permute.xlu0 %1732
        %v1734 = vsel %vm1132, %v1727, 0
        %v1736 = vsel %vm1132, %v1729, 0
        %v1738 = vsel %vm1132, %v1731, 0
        %v1740 = vsel %vm1132, %v1733, 0
        %1742 = vmatpush.xpose.msra.mxu0 0.0
        %1743 = vmatpush.xpose.msra.mxu0 0.0
        %1744 = vmatpush.xpose.msra.mxu0 0.0
        %1745 = vmatpush.xpose.msra.mxu0 0.0
        %1746 = vmatpush.xpose.msra.mxu0 0.0
        %1747 = vmatpush.xpose.msra.mxu0 0.0
        %1748 = vmatpush.xpose.msra.mxu0 0.0
        %1749 = vmatpush.xpose.msra.mxu0 0.0
        %1750 = vmatpush.xpose.msra.mxu0 0.0
        %1751 = vmatpush.xpose.msra.mxu0 0.0
        %1752 = vmatpush.xpose.msra.mxu0 0.0
        %1753 = vmatpush.xpose.msra.mxu0 0.0
        %1754 = vmatpush.xpose.msra.mxu0 0.0
        %1755 = vmatpush.xpose.msra.mxu0 0.0
        %1756 = vmatpush.xpose.msra.mxu0 %v1740
        %1757 = vmatpush.xpose.msra.mxu0 %v1738
        %1758 = vmatmul.f32.gmra.mxu0 %v1734
        %v1759 = vpop.f32.mrf.mxu0
        %v1760 = vadd.f32 0.0, %v1759
        %1761 = vmatmul.f32.gmra.mxu0 %v1736
        %v1762 = vpop.f32.mrf.mxu0
        %v1763 = vadd.f32 0.0, %v1762
        %1764 = vdwg.mxu0
        %1765 = vrot.lane.b32.xlu0 %v1069, 32
        %v1766 = vpop.permute.xlu0 %1765
        %1767 = vrot.lane.b32.xlu0 %v1072, 32
        %v1768 = vpop.permute.xlu0 %1767
        %1769 = vrot.lane.b32.xlu0 %v1098, 32
        %v1770 = vpop.permute.xlu0 %1769
        %1771 = vrot.lane.b32.xlu0 %v1101, 32
        %v1772 = vpop.permute.xlu0 %1771
        %v1773 = vsel %vm1132, %v1766, 0
        %v1775 = vsel %vm1132, %v1768, 0
        %v1777 = vsel %vm1132, %v1770, 0
        %v1779 = vsel %vm1132, %v1772, 0
        %1781 = vmatpush.xpose.msra.mxu0 0.0
        %1782 = vmatpush.xpose.msra.mxu0 0.0
        %1783 = vmatpush.xpose.msra.mxu0 0.0
        %1784 = vmatpush.xpose.msra.mxu0 0.0
        %1785 = vmatpush.xpose.msra.mxu0 0.0
        %1786 = vmatpush.xpose.msra.mxu0 0.0
        %1787 = vmatpush.xpose.msra.mxu0 0.0
        %1788 = vmatpush.xpose.msra.mxu0 0.0
        %1789 = vmatpush.xpose.msra.mxu0 0.0
        %1790 = vmatpush.xpose.msra.mxu0 0.0
        %1791 = vmatpush.xpose.msra.mxu0 0.0
        %1792 = vmatpush.xpose.msra.mxu0 0.0
        %1793 = vmatpush.xpose.msra.mxu0 0.0
        %1794 = vmatpush.xpose.msra.mxu0 0.0
        %1795 = vmatpush.xpose.msra.mxu0 %v1779
        %1796 = vmatpush.xpose.msra.mxu0 %v1777
        %1797 = vmatmul.f32.gmra.mxu0 %v1773
        %v1798 = vpop.f32.mrf.mxu0
        %v1799 = vadd.f32 0.0, %v1798
        %1800 = vmatmul.f32.gmra.mxu0 %v1775
        %v1801 = vpop.f32.mrf.mxu0
        %v1802 = vadd.f32 0.0, %v1801
        %1803 = vdwg.mxu0
        %v1804 = vmul.f32 %v1760, 0.17677669
        %v1805 = vmul.f32 %v1763, 0.17677669
        %v1806 = vmul.f32 %v1799, 0.17677669
        %v1807 = vmul.f32 %v1802, 0.17677669
        %v1808 = vsel %vm1213, %v1804, -1e+30
        %v1809 = vsel %vm1213, %v1805, -1e+30
        %v1810 = vsel %vm1214, %v1806, -1e+30
        %v1811 = vsel %vm1214, %v1807, -1e+30
        %v1812 = vsel %vm1219, %v1808, -inf
        %1813 = vmax.xlane.f32.xlu0 %v1812
        %v1814 = vpop.xlane.xlu0 %1813
        %v1815 = vsel %vm1219, %v1809, -inf
        %1816 = vmax.xlane.f32.xlu0 %v1815
        %v1817 = vpop.xlane.xlu0 %1816
        %v1818 = vsel %vm1219, %v1810, -inf
        %1819 = vmax.xlane.f32.xlu0 %v1818
        %v1820 = vpop.xlane.xlu0 %1819
        %v1821 = vsel %vm1219, %v1811, -inf
        %1822 = vmax.xlane.f32.xlu0 %v1821
        %v1823 = vpop.xlane.xlu0 %1822
        %v1824 = vsub.f32 %v1808, %v1814
        %v1825 = vsub.f32 %v1809, %v1817
        %v1826 = vsub.f32 %v1810, %v1820
        %v1827 = vsub.f32 %v1811, %v1823
        %v1828 = vmul.f32 %v1824, 1.442695
        %v1829 = vpow.pop %v1828
        %v1830 = vmul.f32 %v1825, 1.442695
        %v1831 = vpow.pop %v1830
        %v1832 = vmul.f32 %v1826, 1.442695
        %v1833 = vpow.pop %v1832
        %v1834 = vmul.f32 %v1827, 1.442695
        %v1835 = vpow.pop %v1834
        %v1836 = vsel %vm1219, %v1829, 0.0
        %1837 = vadd.xlane.f32.xlu0 %v1836
        %v1838 = vpop.xlane.xlu0 %1837
        %v1839 = vsel %vm1219, %v1831, 0.0
        %1840 = vadd.xlane.f32.xlu0 %v1839
        %v1841 = vpop.xlane.xlu0 %1840
        %v1842 = vsel %vm1219, %v1833, 0.0
        %1843 = vadd.xlane.f32.xlu0 %v1842
        %v1844 = vpop.xlane.xlu0 %1843
        %v1845 = vsel %vm1219, %v1835, 0.0
        %1846 = vadd.xlane.f32.xlu0 %v1845
        %v1847 = vpop.xlane.xlu0 %1846
        %v1848 = vrcp.pop %v1838
        %v1849 = vrcp.pop %v1841
        %v1850 = vrcp.pop %v1844
        %v1851 = vrcp.pop %v1847
        %v1852 = vmul.f32 %v1829, %v1848
        %v1853 = vmul.f32 %v1831, %v1849
        %v1854 = vmul.f32 %v1833, %v1850
        %v1855 = vmul.f32 %v1835, %v1851
        %1856 = vrot.lane.b32.xlu0 %v1121, 32
        %v1857 = vpop.permute.xlu0 %1856
        %1858 = vrot.lane.b32.xlu0 %v1124, 32
        %v1859 = vpop.permute.xlu0 %1858
        %v1863 = vsel %vm1219, %v1852, 0
        %v1866 = vsel %vm1219, %v1853, 0
        %1868 = vmatpush.msra.mxu0 0.0
        %1869 = vmatpush.msra.mxu0 0.0
        %1870 = vmatpush.msra.mxu0 0.0
        %1871 = vmatpush.msra.mxu0 0.0
        %1872 = vmatpush.msra.mxu0 0.0
        %1873 = vmatpush.msra.mxu0 0.0
        %1874 = vmatpush.msra.mxu0 0.0
        %1875 = vmatpush.msra.mxu0 0.0
        %1876 = vmatpush.msra.mxu0 0.0
        %1877 = vmatpush.msra.mxu0 0.0
        %1878 = vmatpush.msra.mxu0 0.0
        %1879 = vmatpush.msra.mxu0 0.0
        %1880 = vmatpush.msra.mxu0 0.0
        %1881 = vmatpush.msra.mxu0 0.0
        %1882 = vmatpush.msra.mxu0 %v1859
        %1883 = vmatpush.msra.mxu0 %v1857
        %1884 = vmatmul.f32.gmra.mxu0 %v1863
        %v1885 = vpop.f32.mrf.mxu0
        %v1886 = vadd.f32 0.0, %v1885
        %1887 = vmatmul.f32.gmra.mxu0 %v1866
        %v1888 = vpop.f32.mrf.mxu0
        %v1889 = vadd.f32 0.0, %v1888
        %1890 = vdwg.mxu0
        %1891 = vrot.lane.b32.xlu0 %v1127, 32
        %v1892 = vpop.permute.xlu0 %1891
        %1893 = vrot.lane.b32.xlu0 %v1130, 32
        %v1894 = vpop.permute.xlu0 %1893
        %v1898 = vsel %vm1219, %v1854, 0
        %v1901 = vsel %vm1219, %v1855, 0
        %1903 = vmatpush.msra.mxu0 0.0
        %1904 = vmatpush.msra.mxu0 0.0
        %1905 = vmatpush.msra.mxu0 0.0
        %1906 = vmatpush.msra.mxu0 0.0
        %1907 = vmatpush.msra.mxu0 0.0
        %1908 = vmatpush.msra.mxu0 0.0
        %1909 = vmatpush.msra.mxu0 0.0
        %1910 = vmatpush.msra.mxu0 0.0
        %1911 = vmatpush.msra.mxu0 0.0
        %1912 = vmatpush.msra.mxu0 0.0
        %1913 = vmatpush.msra.mxu0 0.0
        %1914 = vmatpush.msra.mxu0 0.0
        %1915 = vmatpush.msra.mxu0 0.0
        %1916 = vmatpush.msra.mxu0 0.0
        %1917 = vmatpush.msra.mxu0 %v1894
        %1918 = vmatpush.msra.mxu0 %v1892
        %1919 = vmatmul.f32.gmra.mxu0 %v1898
        %v1920 = vpop.f32.mrf.mxu0
        %v1921 = vadd.f32 0.0, %v1920
        %1922 = vmatmul.f32.gmra.mxu0 %v1901
        %v1923 = vpop.f32.mrf.mxu0
        %v1924 = vadd.f32 0.0, %v1923
        %1925 = vdwg.mxu0
        %1930 = vrot.lane.b32.xlu0 %v1484, 32
        %v1931 = vpop.permute.xlu0 %1930
        %1932 = vrot.lane.b32.xlu0 %v1487, 32
        %v1933 = vpop.permute.xlu0 %1932
        %1934 = vrot.lane.b32.xlu0 %v1521, 32
        %v1935 = vpop.permute.xlu0 %1934
        %1936 = vrot.lane.b32.xlu0 %v1524, 32
        %v1937 = vpop.permute.xlu0 %1936
        %1946 = vrot.lane.b32.xlu0 %v1686, 64
        %v1947 = vpop.permute.xlu0 %1946
        %1948 = vrot.lane.b32.xlu0 %v1689, 64
        %v1949 = vpop.permute.xlu0 %1948
        %1950 = vrot.lane.b32.xlu0 %v1721, 64
        %v1951 = vpop.permute.xlu0 %1950
        %1952 = vrot.lane.b32.xlu0 %v1724, 64
        %v1953 = vpop.permute.xlu0 %1952
        %1962 = vrot.lane.b32.xlu0 %v1886, 96
        %v1963 = vpop.permute.xlu0 %1962
        %1964 = vrot.lane.b32.xlu0 %v1889, 96
        %v1965 = vpop.permute.xlu0 %1964
        %1966 = vrot.lane.b32.xlu0 %v1921, 96
        %v1967 = vpop.permute.xlu0 %1966
        %1968 = vrot.lane.b32.xlu0 %v1924, 96
        %v1969 = vpop.permute.xlu0 %1968
        %v1974 = vsel %vm1132, %v1288, %v1931
        %v1975 = vsel %vm1132, %v1291, %v1933
        %v1976 = vsel %vm1132, %v1317, %v1935
        %v1977 = vsel %vm1132, %v1320, %v1937
        %vm1978 = vcmask 523264
        %v1979 = vsel %vm1978, %v1974, %v1947
        %v1980 = vsel %vm1978, %v1975, %v1949
        %v1981 = vsel %vm1978, %v1976, %v1951
        %v1982 = vsel %vm1978, %v1977, %v1953
        %vm1983 = vcmask 785408
        %v1984 = vsel %vm1983, %v1979, %v1963
        %v1985 = vsel %vm1983, %v1980, %v1965
        %v1986 = vsel %vm1983, %v1981, %v1967
        %v1987 = vsel %vm1983, %v1982, %v1969
        %v1988 = vld [vmem:[%s764] sm:$0xff]
        %v1989 = vld [vmem:[%s764 + $0x8] sm:$0xff]
        %v1990 = vld [vmem:[%s764 + $0x10] sm:$0xff]
        %v1991 = vld [vmem:[%s764 + $0x18] sm:$0xff]
        %v1992 = vld [vmem:[%s764 + $0x20] sm:$0xff]
        %v1993 = vld [vmem:[%s764 + $0x28] sm:$0xff]
        %v1994 = vld [vmem:[%s764 + $0x30] sm:$0xff]
        %v1995 = vld [vmem:[%s764 + $0x38] sm:$0xff]
        %v1996 = vld [vmem:[%s764 + $0x40] sm:$0xff]
        %v1997 = vld [vmem:[%s764 + $0x48] sm:$0xff]
        %v1998 = vld [vmem:[%s764 + $0x50] sm:$0xff]
        %v1999 = vld [vmem:[%s764 + $0x58] sm:$0xff]
        %v2000 = vld [vmem:[%s764 + $0x60] sm:$0xff]
        %v2001 = vld [vmem:[%s764 + $0x68] sm:$0xff]
        %v2002 = vld [vmem:[%s764 + $0x70] sm:$0xff]
        %v2003 = vld [vmem:[%s764 + $0x78] sm:$0xff]
        %v2004 = vld [vmem:[%s773] sm:$0x1]
        %v2006 = vperm.slane %v2004, 0
        %2008 = vmatpush.msra.mxu0 %v2003
        %2009 = vmatpush.msra.mxu0 %v2002
        %2010 = vmatpush.msra.mxu0 %v2001
        %2011 = vmatpush.msra.mxu0 %v2000
        %2012 = vmatpush.msra.mxu0 %v1999
        %2013 = vmatpush.msra.mxu0 %v1998
        %2014 = vmatpush.msra.mxu0 %v1997
        %2015 = vmatpush.msra.mxu0 %v1996
        %2016 = vmatpush.msra.mxu0 %v1995
        %2017 = vmatpush.msra.mxu0 %v1994
        %2018 = vmatpush.msra.mxu0 %v1993
        %2019 = vmatpush.msra.mxu0 %v1992
        %2020 = vmatpush.msra.mxu0 %v1991
        %2021 = vmatpush.msra.mxu0 %v1990
        %2022 = vmatpush.msra.mxu0 %v1989
        %2023 = vmatpush.msra.mxu0 %v1988
        %2024 = vmatmul.f32.gmra.mxu0 %v1984
        %v2025 = vpop.f32.mrf.mxu0
        %v2026 = vadd.f32 %v2006, %v2025
        %2027 = vmatmul.f32.gmra.mxu0 %v1985
        %v2028 = vpop.f32.mrf.mxu0
        %v2029 = vadd.f32 %v2006, %v2028
        %2030 = vmatmul.f32.gmra.mxu0 %v1986
        %v2031 = vpop.f32.mrf.mxu0
        %v2032 = vadd.f32 %v2006, %v2031
        %2033 = vmatmul.f32.gmra.mxu0 %v1987
        %v2034 = vpop.f32.mrf.mxu0
        %v2035 = vadd.f32 %v2006, %v2034
        %2036 = vdwg.mxu0
        %v2037 = vadd.f32 %v983, %v2026
        %v2038 = vadd.f32 %v984, %v2029
        %v2039 = vadd.f32 %v985, %v2032
        %v2040 = vadd.f32 %v986, %v2035
        %v2041 = vld [vmem:[%s895] sm:$0x1]
        %v2042 = vld [vmem:[%s782] sm:$0x1]
        %2043 = vadd.xlane.f32.xlu0 %v2037
        %v2044 = vpop.xlane.xlu0 %2043
        %2045 = vadd.xlane.f32.xlu0 %v2038
        %v2046 = vpop.xlane.xlu0 %2045
        %2047 = vadd.xlane.f32.xlu0 %v2039
        %v2048 = vpop.xlane.xlu0 %2047
        %2049 = vadd.xlane.f32.xlu0 %v2040
        %v2050 = vpop.xlane.xlu0 %2049
        %v2051 = vrcp.pop 128.0
        %v2052 = vmul.f32 128.0, %v2051
        %v2053 = vsub.f32 1.0, %v2052
        %v2054 = vmul.f32 %v2051, %v2053
        %v2055 = vadd.f32 %v2051, %v2054
        %vm2056 = vweird.f32 %v2051
        %v2057 = vsel %vm2056, %v2051, %v2055
        %v2058 = vmul.f32 %v2044, %v2057
        %v2059 = vmul.f32 %v2046, %v2057
        %v2060 = vmul.f32 %v2048, %v2057
        %v2061 = vmul.f32 %v2050, %v2057
        %v2062 = vsub.f32 %v2037, %v2058
        %v2063 = vsub.f32 %v2038, %v2059
        %v2064 = vsub.f32 %v2039, %v2060
        %v2065 = vsub.f32 %v2040, %v2061
        %v2066 = vmul.f32 %v2062, %v2062
        %v2067 = vmul.f32 %v2063, %v2063
        %v2068 = vmul.f32 %v2064, %v2064
        %v2069 = vmul.f32 %v2065, %v2065
        %2070 = vadd.xlane.f32.xlu0 %v2066
        %v2071 = vpop.xlane.xlu0 %2070
        %2072 = vadd.xlane.f32.xlu0 %v2067
        %v2073 = vpop.xlane.xlu0 %2072
        %2074 = vadd.xlane.f32.xlu0 %v2068
        %v2075 = vpop.xlane.xlu0 %2074
        %2076 = vadd.xlane.f32.xlu0 %v2069
        %v2077 = vpop.xlane.xlu0 %2076
        %v2078 = vmul.f32 %v2071, %v2057
        %v2079 = vmul.f32 %v2073, %v2057
        %v2080 = vmul.f32 %v2075, %v2057
        %v2081 = vmul.f32 %v2077, %v2057
        %v2082 = vadd.f32 %v2078, 1e-06
        %v2083 = vadd.f32 %v2079, 1e-06
        %v2084 = vadd.f32 %v2080, 1e-06
        %v2085 = vadd.f32 %v2081, 1e-06
        %v2086 = vrsqrt.pop %v2082
        %v2087 = vmul.f32 %v2086, %v2082
        %v2088 = vmul.f32 %v2087, %v2086
        %v2089 = vmul.f32 0.5, %v2088
        %v2090 = vsub.f32 1.5, %v2089
        %v2091 = vmul.f32 %v2086, %v2090
        %vm2092 = vweird.f32 %v2082
        %vm2093 = vweird.f32 %v2086
        %vm2094 = vmor %vm2092, %vm2093
        %v2095 = vsel %vm2094, %v2086, %v2091
        %v2096 = vrsqrt.pop %v2083
        %v2097 = vmul.f32 %v2096, %v2083
        %v2098 = vmul.f32 %v2097, %v2096
        %v2099 = vmul.f32 0.5, %v2098
        %v2100 = vsub.f32 1.5, %v2099
        %v2101 = vmul.f32 %v2096, %v2100
        %vm2102 = vweird.f32 %v2083
        %vm2103 = vweird.f32 %v2096
        %vm2104 = vmor %vm2102, %vm2103
        %v2105 = vsel %vm2104, %v2096, %v2101
        %v2106 = vrsqrt.pop %v2084
        %v2107 = vmul.f32 %v2106, %v2084
        %v2108 = vmul.f32 %v2107, %v2106
        %v2109 = vmul.f32 0.5, %v2108
        %v2110 = vsub.f32 1.5, %v2109
        %v2111 = vmul.f32 %v2106, %v2110
        %vm2112 = vweird.f32 %v2084
        %vm2113 = vweird.f32 %v2106
        %vm2114 = vmor %vm2112, %vm2113
        %v2115 = vsel %vm2114, %v2106, %v2111
        %v2116 = vrsqrt.pop %v2085
        %v2117 = vmul.f32 %v2116, %v2085
        %v2118 = vmul.f32 %v2117, %v2116
        %v2119 = vmul.f32 0.5, %v2118
        %v2120 = vsub.f32 1.5, %v2119
        %v2121 = vmul.f32 %v2116, %v2120
        %vm2122 = vweird.f32 %v2085
        %vm2123 = vweird.f32 %v2116
        %vm2124 = vmor %vm2122, %vm2123
        %v2125 = vsel %vm2124, %v2116, %v2121
        %v2126 = vmul.f32 %v2062, %v2095
        %v2127 = vmul.f32 %v2063, %v2105
        %v2128 = vmul.f32 %v2064, %v2115
        %v2129 = vmul.f32 %v2065, %v2125
        %v2131 = vperm.slane %v2041, 0
        %v2133 = vmul.f32 %v2126, %v2131
        %v2134 = vmul.f32 %v2127, %v2131
        %v2135 = vmul.f32 %v2128, %v2131
        %v2136 = vmul.f32 %v2129, %v2131
        %v2138 = vperm.slane %v2042, 0
        %v2140 = vadd.f32 %v2133, %v2138
        %v2141 = vadd.f32 %v2134, %v2138
        %v2142 = vadd.f32 %v2135, %v2138
        %v2143 = vadd.f32 %v2136, %v2138
        %v2144 = vld [vmem:[%s792] sm:$0xff]
        %v2145 = vld [vmem:[%s792 + $0x8] sm:$0xff]
        %v2146 = vld [vmem:[%s792 + $0x10] sm:$0xff]
        %v2147 = vld [vmem:[%s792 + $0x18] sm:$0xff]
        %v2148 = vld [vmem:[%s792 + $0x20] sm:$0xff]
        %v2149 = vld [vmem:[%s792 + $0x28] sm:$0xff]
        %v2150 = vld [vmem:[%s792 + $0x30] sm:$0xff]
        %v2151 = vld [vmem:[%s792 + $0x38] sm:$0xff]
        %v2152 = vld [vmem:[%s792 + $0x40] sm:$0xff]
        %v2153 = vld [vmem:[%s792 + $0x48] sm:$0xff]
        %v2154 = vld [vmem:[%s792 + $0x50] sm:$0xff]
        %v2155 = vld [vmem:[%s792 + $0x58] sm:$0xff]
        %v2156 = vld [vmem:[%s792 + $0x60] sm:$0xff]
        %v2157 = vld [vmem:[%s792 + $0x68] sm:$0xff]
        %v2158 = vld [vmem:[%s792 + $0x70] sm:$0xff]
        %v2159 = vld [vmem:[%s792 + $0x78] sm:$0xff]
        %v2160 = vld [vmem:[%s792 + $0x80] sm:$0xff]
        %v2161 = vld [vmem:[%s792 + $0x88] sm:$0xff]
        %v2162 = vld [vmem:[%s792 + $0x90] sm:$0xff]
        %v2163 = vld [vmem:[%s792 + $0x98] sm:$0xff]
        %v2164 = vld [vmem:[%s792 + $0xa0] sm:$0xff]
        %v2165 = vld [vmem:[%s792 + $0xa8] sm:$0xff]
        %v2166 = vld [vmem:[%s792 + $0xb0] sm:$0xff]
        %v2167 = vld [vmem:[%s792 + $0xb8] sm:$0xff]
        %v2168 = vld [vmem:[%s792 + $0xc0] sm:$0xff]
        %v2169 = vld [vmem:[%s792 + $0xc8] sm:$0xff]
        %v2170 = vld [vmem:[%s792 + $0xd0] sm:$0xff]
        %v2171 = vld [vmem:[%s792 + $0xd8] sm:$0xff]
        %v2172 = vld [vmem:[%s792 + $0xe0] sm:$0xff]
        %v2173 = vld [vmem:[%s792 + $0xe8] sm:$0xff]
        %v2174 = vld [vmem:[%s792 + $0xf0] sm:$0xff]
        %v2175 = vld [vmem:[%s792 + $0xf8] sm:$0xff]
        %v2176 = vld [vmem:[%s899] sm:$0x3]
        %v2178 = vperm.slane %v2176, 0
        %v2179 = vperm.slane %v2176, 1
        %2182 = vmatpush.msra.mxu0 %v2174
        %2183 = vmatpush.msra.mxu0 %v2172
        %2184 = vmatpush.msra.mxu0 %v2170
        %2185 = vmatpush.msra.mxu0 %v2168
        %2186 = vmatpush.msra.mxu0 %v2166
        %2187 = vmatpush.msra.mxu0 %v2164
        %2188 = vmatpush.msra.mxu0 %v2162
        %2189 = vmatpush.msra.mxu0 %v2160
        %2190 = vmatpush.msra.mxu0 %v2158
        %2191 = vmatpush.msra.mxu0 %v2156
        %2192 = vmatpush.msra.mxu0 %v2154
        %2193 = vmatpush.msra.mxu0 %v2152
        %2194 = vmatpush.msra.mxu0 %v2150
        %2195 = vmatpush.msra.mxu0 %v2148
        %2196 = vmatpush.msra.mxu0 %v2146
        %2197 = vmatpush.msra.mxu0 %v2144
        %2198 = vmatmul.f32.gmra.mxu0 %v2140
        %v2199 = vpop.f32.mrf.mxu0
        %v2200 = vadd.f32 %v2178, %v2199
        %2201 = vmatmul.f32.gmra.mxu0 %v2141
        %v2202 = vpop.f32.mrf.mxu0
        %v2203 = vadd.f32 %v2178, %v2202
        %2204 = vmatmul.f32.gmra.mxu0 %v2142
        %v2205 = vpop.f32.mrf.mxu0
        %v2206 = vadd.f32 %v2178, %v2205
        %2207 = vmatmul.f32.gmra.mxu0 %v2143
        %v2208 = vpop.f32.mrf.mxu0
        %v2209 = vadd.f32 %v2178, %v2208
        %2210 = vdwg.mxu0
        %2211 = vmatpush.msra.mxu0 %v2175
        %2212 = vmatpush.msra.mxu0 %v2173
        %2213 = vmatpush.msra.mxu0 %v2171
        %2214 = vmatpush.msra.mxu0 %v2169
        %2215 = vmatpush.msra.mxu0 %v2167
        %2216 = vmatpush.msra.mxu0 %v2165
        %2217 = vmatpush.msra.mxu0 %v2163
        %2218 = vmatpush.msra.mxu0 %v2161
        %2219 = vmatpush.msra.mxu0 %v2159
        %2220 = vmatpush.msra.mxu0 %v2157
        %2221 = vmatpush.msra.mxu0 %v2155
        %2222 = vmatpush.msra.mxu0 %v2153
        %2223 = vmatpush.msra.mxu0 %v2151
        %2224 = vmatpush.msra.mxu0 %v2149
        %2225 = vmatpush.msra.mxu0 %v2147
        %2226 = vmatpush.msra.mxu0 %v2145
        %2227 = vmatmul.f32.gmra.mxu0 %v2140
        %v2228 = vpop.f32.mrf.mxu0
        %v2229 = vadd.f32 %v2179, %v2228
        %2230 = vmatmul.f32.gmra.mxu0 %v2141
        %v2231 = vpop.f32.mrf.mxu0
        %v2232 = vadd.f32 %v2179, %v2231
        %2233 = vmatmul.f32.gmra.mxu0 %v2142
        %v2234 = vpop.f32.mrf.mxu0
        %v2235 = vadd.f32 %v2179, %v2234
        %2236 = vmatmul.f32.gmra.mxu0 %v2143
        %v2237 = vpop.f32.mrf.mxu0
        %v2238 = vadd.f32 %v2179, %v2237
        %2239 = vdwg.mxu0
        %v2240 = vmax.f32 %v2200, 0.0
        %v2241 = vmax.f32 %v2229, 0.0
        %v2242 = vmax.f32 %v2203, 0.0
        %v2243 = vmax.f32 %v2232, 0.0
        %v2244 = vmax.f32 %v2206, 0.0
        %v2245 = vmax.f32 %v2235, 0.0
        %v2246 = vmax.f32 %v2209, 0.0
        %v2247 = vmax.f32 %v2238, 0.0
        %v2248 = vld [vmem:[%s802] sm:$0xff]
        %v2249 = vld [vmem:[%s802 + $0x8] sm:$0xff]
        %v2250 = vld [vmem:[%s802 + $0x10] sm:$0xff]
        %v2251 = vld [vmem:[%s802 + $0x18] sm:$0xff]
        %v2252 = vld [vmem:[%s802 + $0x20] sm:$0xff]
        %v2253 = vld [vmem:[%s802 + $0x28] sm:$0xff]
        %v2254 = vld [vmem:[%s802 + $0x30] sm:$0xff]
        %v2255 = vld [vmem:[%s802 + $0x38] sm:$0xff]
        %v2256 = vld [vmem:[%s802 + $0x40] sm:$0xff]
        %v2257 = vld [vmem:[%s802 + $0x48] sm:$0xff]
        %v2258 = vld [vmem:[%s802 + $0x50] sm:$0xff]
        %v2259 = vld [vmem:[%s802 + $0x58] sm:$0xff]
        %v2260 = vld [vmem:[%s802 + $0x60] sm:$0xff]
        %v2261 = vld [vmem:[%s802 + $0x68] sm:$0xff]
        %v2262 = vld [vmem:[%s802 + $0x70] sm:$0xff]
        %v2263 = vld [vmem:[%s802 + $0x78] sm:$0xff]
        %v2264 = vld [vmem:[%s802 + $0x80] sm:$0xff]
        %v2265 = vld [vmem:[%s802 + $0x88] sm:$0xff]
        %v2266 = vld [vmem:[%s802 + $0x90] sm:$0xff]
        %v2267 = vld [vmem:[%s802 + $0x98] sm:$0xff]
        %v2268 = vld [vmem:[%s802 + $0xa0] sm:$0xff]
        %v2269 = vld [vmem:[%s802 + $0xa8] sm:$0xff]
        %v2270 = vld [vmem:[%s802 + $0xb0] sm:$0xff]
        %v2271 = vld [vmem:[%s802 + $0xb8] sm:$0xff]
        %v2272 = vld [vmem:[%s802 + $0xc0] sm:$0xff]
        %v2273 = vld [vmem:[%s802 + $0xc8] sm:$0xff]
        %v2274 = vld [vmem:[%s802 + $0xd0] sm:$0xff]
        %v2275 = vld [vmem:[%s802 + $0xd8] sm:$0xff]
        %v2276 = vld [vmem:[%s802 + $0xe0] sm:$0xff]
        %v2277 = vld [vmem:[%s802 + $0xe8] sm:$0xff]
        %v2278 = vld [vmem:[%s802 + $0xf0] sm:$0xff]
        %v2279 = vld [vmem:[%s802 + $0xf8] sm:$0xff]
        %v2280 = vld [vmem:[%s902] sm:$0x1]
        %v2282 = vperm.slane %v2280, 0
        %2284 = vmatpush.msra.mxu0 %v2263
        %2285 = vmatpush.msra.mxu0 %v2262
        %2286 = vmatpush.msra.mxu0 %v2261
        %2287 = vmatpush.msra.mxu0 %v2260
        %2288 = vmatpush.msra.mxu0 %v2259
        %2289 = vmatpush.msra.mxu0 %v2258
        %2290 = vmatpush.msra.mxu0 %v2257
        %2291 = vmatpush.msra.mxu0 %v2256
        %2292 = vmatpush.msra.mxu0 %v2255
        %2293 = vmatpush.msra.mxu0 %v2254
        %2294 = vmatpush.msra.mxu0 %v2253
        %2295 = vmatpush.msra.mxu0 %v2252
        %2296 = vmatpush.msra.mxu0 %v2251
        %2297 = vmatpush.msra.mxu0 %v2250
        %2298 = vmatpush.msra.mxu0 %v2249
        %2299 = vmatpush.msra.mxu0 %v2248
        %2300 = vmatmul.f32.gmra.mxu0 %v2240
        %v2301 = vpop.f32.mrf.mxu0
        %v2302 = vadd.f32 %v2282, %v2301
        %2303 = vmatmul.f32.gmra.mxu0 %v2242
        %v2304 = vpop.f32.mrf.mxu0
        %v2305 = vadd.f32 %v2282, %v2304
        %2306 = vmatmul.f32.gmra.mxu0 %v2244
        %v2307 = vpop.f32.mrf.mxu0
        %v2308 = vadd.f32 %v2282, %v2307
        %2309 = vmatmul.f32.gmra.mxu0 %v2246
        %v2310 = vpop.f32.mrf.mxu0
        %v2311 = vadd.f32 %v2282, %v2310
        %2312 = vdwg.mxu0
        %2313 = vmatpush.msra.mxu0 %v2279
        %2314 = vmatpush.msra.mxu0 %v2278
        %2315 = vmatpush.msra.mxu0 %v2277
        %2316 = vmatpush.msra.mxu0 %v2276
        %2317 = vmatpush.msra.mxu0 %v2275
        %2318 = vmatpush.msra.mxu0 %v2274
        %2319 = vmatpush.msra.mxu0 %v2273
        %2320 = vmatpush.msra.mxu0 %v2272
        %2321 = vmatpush.msra.mxu0 %v2271
        %2322 = vmatpush.msra.mxu0 %v2270
        %2323 = vmatpush.msra.mxu0 %v2269
        %2324 = vmatpush.msra.mxu0 %v2268
        %2325 = vmatpush.msra.mxu0 %v2267
        %2326 = vmatpush.msra.mxu0 %v2266
        %2327 = vmatpush.msra.mxu0 %v2265
        %2328 = vmatpush.msra.mxu0 %v2264
        %2329 = vmatmul.f32.gmra.mxu0 %v2241
        %v2330 = vpop.f32.mrf.mxu0
        %v2331 = vadd.f32 %v2302, %v2330
        %2332 = vmatmul.f32.gmra.mxu0 %v2243
        %v2333 = vpop.f32.mrf.mxu0
        %v2334 = vadd.f32 %v2305, %v2333
        %2335 = vmatmul.f32.gmra.mxu0 %v2245
        %v2336 = vpop.f32.mrf.mxu0
        %v2337 = vadd.f32 %v2308, %v2336
        %2338 = vmatmul.f32.gmra.mxu0 %v2247
        %v2339 = vpop.f32.mrf.mxu0
        %v2340 = vadd.f32 %v2311, %v2339
        %2341 = vdwg.mxu0
        %v2342 = vadd.f32 %v2140, %v2331
        %v2343 = vadd.f32 %v2141, %v2334
        %v2344 = vadd.f32 %v2142, %v2337
        %v2345 = vadd.f32 %v2143, %v2340
        %v2346 = vld [vmem:[%s905] sm:$0x1]
        %v2347 = vld [vmem:[%s908] sm:$0x1]
        %2348 = vadd.xlane.f32.xlu0 %v2342
        %v2349 = vpop.xlane.xlu0 %2348
        %2350 = vadd.xlane.f32.xlu0 %v2343
        %v2351 = vpop.xlane.xlu0 %2350
        %2352 = vadd.xlane.f32.xlu0 %v2344
        %v2353 = vpop.xlane.xlu0 %2352
        %2354 = vadd.xlane.f32.xlu0 %v2345
        %v2355 = vpop.xlane.xlu0 %2354
        %v2356 = vmul.f32 %v2349, %v2057
        %v2357 = vmul.f32 %v2351, %v2057
        %v2358 = vmul.f32 %v2353, %v2057
        %v2359 = vmul.f32 %v2355, %v2057
        %v2360 = vsub.f32 %v2342, %v2356
        %v2361 = vsub.f32 %v2343, %v2357
        %v2362 = vsub.f32 %v2344, %v2358
        %v2363 = vsub.f32 %v2345, %v2359
        %v2364 = vmul.f32 %v2360, %v2360
        %v2365 = vmul.f32 %v2361, %v2361
        %v2366 = vmul.f32 %v2362, %v2362
        %v2367 = vmul.f32 %v2363, %v2363
        %2368 = vadd.xlane.f32.xlu0 %v2364
        %v2369 = vpop.xlane.xlu0 %2368
        %2370 = vadd.xlane.f32.xlu0 %v2365
        %v2371 = vpop.xlane.xlu0 %2370
        %2372 = vadd.xlane.f32.xlu0 %v2366
        %v2373 = vpop.xlane.xlu0 %2372
        %2374 = vadd.xlane.f32.xlu0 %v2367
        %v2375 = vpop.xlane.xlu0 %2374
        %v2376 = vmul.f32 %v2369, %v2057
        %v2377 = vmul.f32 %v2371, %v2057
        %v2378 = vmul.f32 %v2373, %v2057
        %v2379 = vmul.f32 %v2375, %v2057
        %v2380 = vadd.f32 %v2376, 1e-06
        %v2381 = vadd.f32 %v2377, 1e-06
        %v2382 = vadd.f32 %v2378, 1e-06
        %v2383 = vadd.f32 %v2379, 1e-06
        %v2384 = vrsqrt.pop %v2380
        %v2385 = vmul.f32 %v2384, %v2380
        %v2386 = vmul.f32 %v2385, %v2384
        %v2387 = vmul.f32 0.5, %v2386
        %v2388 = vsub.f32 1.5, %v2387
        %v2389 = vmul.f32 %v2384, %v2388
        %vm2390 = vweird.f32 %v2380
        %vm2391 = vweird.f32 %v2384
        %vm2392 = vmor %vm2390, %vm2391
        %v2393 = vsel %vm2392, %v2384, %v2389
        %v2394 = vrsqrt.pop %v2381
        %v2395 = vmul.f32 %v2394, %v2381
        %v2396 = vmul.f32 %v2395, %v2394
        %v2397 = vmul.f32 0.5, %v2396
        %v2398 = vsub.f32 1.5, %v2397
        %v2399 = vmul.f32 %v2394, %v2398
        %vm2400 = vweird.f32 %v2381
        %vm2401 = vweird.f32 %v2394
        %vm2402 = vmor %vm2400, %vm2401
        %v2403 = vsel %vm2402, %v2394, %v2399
        %v2404 = vrsqrt.pop %v2382
        %v2405 = vmul.f32 %v2404, %v2382
        %v2406 = vmul.f32 %v2405, %v2404
        %v2407 = vmul.f32 0.5, %v2406
        %v2408 = vsub.f32 1.5, %v2407
        %v2409 = vmul.f32 %v2404, %v2408
        %vm2410 = vweird.f32 %v2382
        %vm2411 = vweird.f32 %v2404
        %vm2412 = vmor %vm2410, %vm2411
        %v2413 = vsel %vm2412, %v2404, %v2409
        %v2414 = vrsqrt.pop %v2383
        %v2415 = vmul.f32 %v2414, %v2383
        %v2416 = vmul.f32 %v2415, %v2414
        %v2417 = vmul.f32 0.5, %v2416
        %v2418 = vsub.f32 1.5, %v2417
        %v2419 = vmul.f32 %v2414, %v2418
        %vm2420 = vweird.f32 %v2383
        %vm2421 = vweird.f32 %v2414
        %vm2422 = vmor %vm2420, %vm2421
        %v2423 = vsel %vm2422, %v2414, %v2419
        %v2424 = vmul.f32 %v2360, %v2393
        %v2425 = vmul.f32 %v2361, %v2403
        %v2426 = vmul.f32 %v2362, %v2413
        %v2427 = vmul.f32 %v2363, %v2423
        %v2429 = vperm.slane %v2346, 0
        %v2431 = vmul.f32 %v2424, %v2429
        %v2432 = vmul.f32 %v2425, %v2429
        %v2433 = vmul.f32 %v2426, %v2429
        %v2434 = vmul.f32 %v2427, %v2429
        %v2436 = vperm.slane %v2347, 0
        %v2438 = vadd.f32 %v2431, %v2436
        %v2439 = vadd.f32 %v2432, %v2436
        %v2440 = vadd.f32 %v2433, %v2436
        %v2441 = vadd.f32 %v2434, %v2436
        %2442 = vst [vmem:[#allocation17] sm:$0xff] %v2438
        %2443 = vst [vmem:[#allocation17 + $0x8] sm:$0xff] %v2439
        %2444 = vst [vmem:[#allocation17 + $0x10] sm:$0xff] %v2440
        %2445 = vst [vmem:[#allocation17 + $0x18] sm:$0xff] %v2441
        // Predicated region
        $region137: #{tpu_custom_call.1} parent=87 // pred_check
          %p2446 = pneg %p462
        $region138: #{tpu_custom_call.1} parent=87 // pred_check_branch
          %2448 = sbr.rel (%p2446) target = $region140
        $region139: #{tpu_custom_call.1} parent=87 // pred_region
          %2450 = vsyncadd [#allocation4], 0
          %s2451 = sshll.u32 [#allocation17], 4
          %s2452 = int_to_ptr.vmem [resolvable:$true] %s2451
          %s2453 = sshll.u32 %s17, 4
          %s2454 = int_to_ptr.hbm [resolvable:$true] %s2453
          %2459 = dma.vmem_to_hbm [thread:$0]  %s2452, 512, %s2454, [#allocation4], 128, 128, 8
        $region140: #{tpu_custom_call.1} parent=87 // pred_fallthru
          _
        // Predicated region
        $region141: #{tpu_custom_call.1} parent=87 // pred_check
          %p2460 = pneg %p462
        $region142: #{tpu_custom_call.1} parent=87 // pred_check_branch
          %2462 = sbr.rel (%p2460) target = $region144
        $region143: #{tpu_custom_call.1} parent=87 // pred_region
          %2464 = dma.done [#allocation4], 512
        $region144: #{tpu_custom_call.1} parent=87 // pred_fallthru
          _
      $region88: #{tpu_custom_call.1} parent=5 // pred_fallthru
        _
      %p2465 = scmp.le.s32.totalorder 2, %s27
      // Predicated region
      $region145: #{tpu_custom_call.1} parent=5 // pred_check
        %p2466 = pneg %p2465
      $region146: #{tpu_custom_call.1} parent=5 // pred_check_branch
        %2468 = sbr.rel (%p2466) target = $region148
      $region147: #{tpu_custom_call.1} parent=5 // pred_region
        %s2469 = ssub.s32 %s27, 2
      $region148: #{tpu_custom_call.1} parent=5 // pred_fallthru
        _
    $region6: #{tpu_custom_call.1} parent=1 // loop_footer
      %s31 = sadd.s32 1, %s27
    $region7: #{tpu_custom_call.1} parent=1 // loop_footer_branch
      %26 = sbr.rel target = $region3
    $region8: #{tpu_custom_call.1} parent=1 // loop_exit
      _
    %2470 = vsyncpa [#allocation3], 1
    %s2471 = scalar_lea.sflag [#allocation3], 1
    %2472 = vsyncpa %s2471, 1
    %2473 = vsyncpa [#allocation6], 1
    %2474 = vsyncpa [#allocation9], 1
    %2475 = vsyncpa [#allocation4], 1
    %s2476 = scalar_lea.sflag [#allocation4], 1
    %2477 = vsyncpa %s2476, 1

</llo_original>
